<compile_context>
chip_gen: v7x
topology: tpu7x:2x2x1
jax: 0.10.0
libtpu: 0.0.40
codegen_flags: <defaults>
</compile_context>

<pallas_src>
import functools

import jax
import jax.numpy as jnp
from jax.experimental import pallas as pl
from jax.experimental.pallas import tpu as pltpu


def _round_up(x, m):
    return (x + m - 1) // m * m


def _topk_threshold(a, k):
    """Per-row k-th largest value of `a` (counted with multiplicity, like torch.topk).

    `a` is non-negative except for -inf in masked (padded) columns. The returned
    threshold is an actual element of each row, so `a >= thr` reproduces torch's
    `h.abs() >= topk_values[:, -1]` tie behaviour exactly.
    """
    thr = jnp.max(a, axis=1, keepdims=True)
    if k <= 1:
        return thr

    if k <= 16:
        # Count-aware max chain: lower thr to the next distinct value only while
        # fewer than k elements are >= thr (duplicates counted like torch.topk).
        def step(t):
            cnt = jnp.sum((a >= t).astype(jnp.float32), axis=1, keepdims=True)
            nxt = jnp.max(jnp.where(a >= t, -jnp.inf, a), axis=1, keepdims=True)
            return jnp.where(cnt >= k, t, nxt)

        if k <= 8:
            for _ in range(k - 1):                   # short chain: unrolled, LLO-visible
                thr = step(thr)
        else:
            thr = jax.lax.fori_loop(0, k - 1, lambda _, t: step(t), thr, unroll=True)
        return thr

    # Large k: exact bisection on the f32 bit pattern. For non-negative floats the
    # int32 order equals the float order; -inf padding is negative as int32, so it
    # never counts against a non-negative pivot. 31 iterations converge hi-lo to 1,
    # leaving lo == bit pattern of the k-th largest element (with multiplicity).
    a_bits = pltpu.bitcast(a, jnp.int32)
    hi = pltpu.bitcast(thr, jnp.int32) + 1           # count(a_bits >= hi) == 0 < k
    lo = jnp.zeros_like(hi)                          # count(a_bits >= 0) == hidden_dim >= k

    def body(_, carry):
        lo, hi = carry
        mid = lo + (hi - lo) // 2                    # avoids int32 overflow
        cnt = jnp.sum((a_bits >= mid).astype(jnp.int32), axis=1, keepdims=True)
        ge = cnt >= k
        return jnp.where(ge, mid, lo), jnp.where(ge, hi, mid)

    lo, _ = jax.lax.fori_loop(0, 31, body, (lo, hi))
    return pltpu.bitcast(lo, jnp.float32)


def _sae_kernel(x_ref, we_ref, be_ref, wd_ref, bd_ref,
                recon_ref, hs_ref, act_ref, stats_ref,
                *, k, b_real, h_real, h_pad, tile_b, mask_rows):
    """Encoder -> top-k sparsify -> decoder, plus fused metric partials.

    x_ref   : (TILE_B, D_pad) bf16
    we_ref  : (D_pad, H_pad)  bf16   encoder weight (PyTorch weight.T), VMEM-resident
    be_ref  : (1, H_pad)      f32
    wd_ref  : (H_pad, D_pad)  bf16   decoder weight (PyTorch weight.T), VMEM-resident
    bd_ref  : (1, D_pad)      f32
    recon_ref : (TILE_B, D_pad) f32
    hs_ref    : (TILE_B, H_pad) f32
    act_ref   : (1, 1, H_pad)   f32  per-tile per-neuron nonzero counts
    stats_ref : (1, 1, 128)     f32  per-tile [nnz, sum|h_s|, sum h_s^2, 0...]
    """
    x = x_ref[...]

    # ---- encoder (MXU: bf16 inputs, f32 accumulation) ----
    h = jnp.dot(x, we_ref[...], preferred_element_type=jnp.float32) + be_ref[...]

    # ---- per-row top-k threshold on |h| ----
    a = jnp.abs(h)
    if h_real != h_pad:
        # exclude padded H columns (only emitted when padding actually exists)
        col = jax.lax.broadcasted_iota(jnp.int32, a.shape, 1)
        a = jnp.where(col < h_real, a, -jnp.inf)
    thr = _topk_threshold(a, k)

    # ---- sparsify (ties at the threshold kept, like torch) ----
    keep = a >= thr
    if mask_rows:
        # zero padded batch rows so fused metrics stay exact (only when B % TILE_B != 0)
        row = pl.program_id(0) * tile_b + jax.lax.broadcasted_iota(jnp.int32, a.shape, 0)
        keep = jnp.logical_and(keep, row < b_real)
    h_sparse = jnp.where(keep, h, 0.0)
    hs_ref[...] = h_sparse

    # ---- decoder (MXU: bf16 inputs, f32 accumulation) ----
    recon_ref[...] = (
        jnp.dot(h_sparse.astype(wd_ref.dtype), wd_ref[...],
                preferred_element_type=jnp.float32)
        + bd_ref[...]
    )

    # ---- fused metric partials ----
    nz = (h_sparse != 0.0).astype(jnp.float32)
    act_ref[...] = jnp.sum(nz, axis=0, keepdims=True)[None]          # (1, 1, H_pad)
    nnz = jnp.sum(nz)
    s_abs = jnp.sum(jnp.abs(h_sparse))
    s_sq = jnp.sum(h_sparse * h_sparse)
    lane = jax.lax.broadcasted_iota(jnp.int32, (1, 128), 1)
    stats_ref[...] = jnp.where(lane == 0, nnz,
                        jnp.where(lane == 1, s_abs,
                            jnp.where(lane == 2, s_sq, 0.0)))[None]  # (1, 1, 128)


def _select_tile_b(b, d_pad, h_pad):
    """Generation- and weight-aware batch-tile selection plus scoped-VMEM budget."""
    bf16, f32 = 2, 4
    try:
        cap = int(pltpu.get_tpu_info().vmem_capacity_bytes)   # 128 MiB v5e/v6e, 64 MiB/TC v7x
    except Exception:
        cap = 64 << 20
    budget = int(cap * 0.8)

    weights = 2 * d_pad * h_pad * bf16                        # W_enc + W_dec, single-buffered
    biases = 2 * 2 * (h_pad + d_pad) * f32                    # double-buffered bias rows
    fixed = weights + biases + (2 << 20)                      # + compiler slack
    # TODO(synk): when `weights` alone exceeds ~0.5*budget, tile the H axis with an inner
    # pltpu.emit_pipeline (stream W_enc column blocks / W_dec row blocks + f32 accumulator)
    # instead of keeping both weights fully VMEM-resident (matters first on v7x, 64 MiB/TC).
    avail = max(budget - fixed, 4 << 20)

    # per-batch-row VMEM: double-buffered x / recon / h_sparse blocks + ~4 f32 H_pad temps
    per_row = (2 * d_pad * bf16) + (2 * d_pad * f32) + (2 * h_pad * f32) + (4 * h_pad * f32)
    max_rows = int(avail // per_row)

    tile_b = min(512, _round_up(b, 8), max(max_rows, 8))
    if tile_b >= 256:
        tile_b = (tile_b // 256) * 256    # 256-row waves keep the 2x256x256 MXU (v6e/v7x) full
    else:
        tile_b = max(8, (tile_b // 8) * 8)
    return tile_b, budget


def prepare_params(params):
    """Hoisted (one-time) cast/pad of the parameters to padded bf16/f32 device arrays."""
    w_enc, b_enc, w_dec, b_dec = params
    d_in, h_dim = w_enc.shape
    d_pad, h_pad = _round_up(d_in, 128), _round_up(h_dim, 128)
    return {
        "we": jnp.pad(w_enc.astype(jnp.bfloat16), ((0, d_pad - d_in), (0, h_pad - h_dim))),
        "wd": jnp.pad(w_dec.astype(jnp.bfloat16), ((0, h_pad - h_dim), (0, d_pad - d_in))),
        "be": jnp.pad(b_enc.astype(jnp.float32), (0, h_pad - h_dim)).reshape(1, h_pad),
        "bd": jnp.pad(b_dec.astype(jnp.float32), (0, d_pad - d_in)).reshape(1, d_pad),
        "d_in": d_in, "h_dim": h_dim, "d_pad": d_pad, "h_pad": h_pad,
    }


def sparse_autoencoder_forward(x, params, k):
    """Forward pass mirroring SparseAutoencoder.forward (sparsity_method='topk').

    `params` is either the raw (w_enc, b_enc, w_dec, b_dec) tuple or the result of
    prepare_params(...). Returns (x_recon, h_sparse, metrics); metrics values are
    JAX scalars (no host sync inside the forward path).
    """
    prepared = params if isinstance(params, dict) else prepare_params(params)
    d_in, h_dim = prepared["d_in"], prepared["h_dim"]
    d_pad, h_pad = prepared["d_pad"], prepared["h_pad"]
    if x.shape[-1] != d_in:
        raise ValueError(f"last dim of x ({x.shape[-1]}) != input_dim ({d_in})")
    if k > h_dim:
        raise ValueError(f"k={k} must be <= hidden_dim={h_dim} (torch.topk would raise)")

    input_shape = x.shape
    x2d = x.reshape(-1, d_in)
    b = x2d.shape[0]

    tile_b, vmem_budget = _select_tile_b(b, d_pad, h_pad)
    b_pad = _round_up(b, tile_b)
    n_tiles = b_pad // tile_b
    mask_rows = (b_pad != b)

    x_p = jnp.pad(x2d.astype(jnp.bfloat16), ((0, b_pad - b), (0, d_pad - d_in)))

    kern = functools.partial(_sae_kernel, k=int(k), b_real=b, h_real=h_dim,
                             h_pad=h_pad, tile_b=tile_b, mask_rows=mask_rows)

    def run(single_buffer_weights):
        w_mode = pl.Buffered(1) if single_buffer_weights else None
        return pl.pallas_call(
            kern,
            grid=(n_tiles,),
            out_shape=(
                jax.ShapeDtypeStruct((b_pad, d_pad), jnp.float32),
                jax.ShapeDtypeStruct((b_pad, h_pad), jnp.float32),
                jax.ShapeDtypeStruct((n_tiles, 1, h_pad), jnp.float32),
                jax.ShapeDtypeStruct((n_tiles, 1, 128), jnp.float32),
            ),
            in_specs=[
                pl.BlockSpec((tile_b, d_pad), lambda i: (i, 0)),                       # x tile
                pl.BlockSpec((d_pad, h_pad), lambda i: (0, 0), pipeline_mode=w_mode),  # W_enc
                pl.BlockSpec((1, h_pad), lambda i: (0, 0)),                            # b_enc
                pl.BlockSpec((h_pad, d_pad), lambda i: (0, 0), pipeline_mode=w_mode),  # W_dec
                pl.BlockSpec((1, d_pad), lambda i: (0, 0)),                            # b_dec
            ],
            out_specs=(
                pl.BlockSpec((tile_b, d_pad), lambda i: (i, 0)),        # recon tile
                pl.BlockSpec((tile_b, h_pad), lambda i: (i, 0)),        # h_sparse tile
                pl.BlockSpec((1, 1, h_pad), lambda i: (i, 0, 0)),       # per-tile neuron counts
                pl.BlockSpec((1, 1, 128), lambda i: (i, 0, 0)),         # per-tile scalar stats
            ),
            compiler_params=pltpu.CompilerParams(
                dimension_semantics=("parallel",),      # v7x megacore; no-op on v5e/v6e
                vmem_limit_bytes=int(vmem_budget),
            ),
        )(x_p, prepared["we"], prepared["be"], prepared["wd"], prepared["bd"])

    try:
        recon_p, hs_p, act_p, stats_p = run(True)
    except Exception:
        # TODO(synk): drop this fallback once pl.Buffered(1) single-buffering of
        # constant-index operands is guaranteed by the installed JAX version.
        recon_p, hs_p, act_p, stats_p = run(False)

    x_recon = recon_p[:b, :d_in].reshape(input_shape)
    h_sparse = hs_p[:b, :h_dim]

    # ---- metrics from the in-kernel partial reductions (pure JAX, no device_get) ----
    active = act_p.reshape(n_tiles, h_pad)[:, :h_dim].sum(axis=0)     # per-neuron counts
    totals = stats_p.reshape(n_tiles, 128).sum(axis=0)
    nnz, s_abs, s_sq = totals[0], totals[1], totals[2]
    n = jnp.float32(b * h_dim)
    mean_abs = s_abs / n                                              # mean of |h_sparse|
    # unbiased (ddof=1) variance of |h_sparse| (zeros included), like torch h_sparse.abs().std()
    var = jnp.maximum(s_sq - n * mean_abs * mean_abs, 0.0) / jnp.maximum(n - 1.0, 1.0)
    metrics = {
        "sparsity_ratio": 1.0 - nnz / n,
        "neuron_diversity": jnp.sum((active > 0).astype(jnp.float32)) / h_dim,
        "dead_neurons": jnp.sum((active == 0).astype(jnp.int32)),
        "mean_activation": mean_abs,
        "std_activation": jnp.sqrt(var),
    }
    return x_recon, h_sparse, metrics


def init_params(key, input_dim, hidden_dim):
    """Deterministic init mimicking nn.Linear's U(-1/sqrt(fan_in), 1/sqrt(fan_in))."""
    k1, k2, k3, k4 = jax.random.split(key, 4)
    be = 1.0 / jnp.sqrt(jnp.float32(input_dim))
    bd = 1.0 / jnp.sqrt(jnp.float32(hidden_dim))
    w_enc = jax.random.uniform(k1, (input_dim, hidden_dim), jnp.float32, -be, be)
    b_enc = jax.random.uniform(k2, (hidden_dim,), jnp.float32, -be, be)
    w_dec = jax.random.uniform(k3, (hidden_dim, input_dim), jnp.float32, -bd, bd)
    b_dec = jax.random.uniform(k4, (input_dim,), jnp.float32, -bd, bd)
    return w_enc, b_enc, w_dec, b_dec


def _reference_forward(x, params, k):
    """Pure-JAX reference with matching bf16 rounding of matmul inputs."""
    w_enc, b_enc, w_dec, b_dec = params
    x2 = x.reshape(-1, x.shape[-1])
    xb = x2.astype(jnp.bfloat16).astype(jnp.float32)
    web = w_enc.astype(jnp.bfloat16).astype(jnp.float32)
    wdb = w_dec.astype(jnp.bfloat16).astype(jnp.float32)
    h = xb @ web + b_enc
    a = jnp.abs(h)
    thr = jnp.sort(a, axis=1)[:, -k][:, None]        # k-th largest, multiplicity counted
    h_s = jnp.where(a >= thr, h, 0.0)
    recon = (h_s.astype(jnp.bfloat16).astype(jnp.float32) @ wdb + b_dec).reshape(x.shape)
    return recon, h_s


if __name__ == "__main__":
    key = jax.random.PRNGKey(0)
    kx1, kp1, kx2, kx3, kp3 = jax.random.split(key, 5)

    # --- case 1: small dims, unrolled count-aware top-k chain (k <= 8) ---
    INPUT_DIM, HIDDEN_DIM, K = 16, 32, 4
    x = jax.random.normal(kx1, (2, 4, INPUT_DIM), jnp.float32)   # flattened to (8, 16) inside
    params = init_params(kp1, INPUT_DIM, HIDDEN_DIM)
    prepared = prepare_params(params)                 # hoisted cast/pad, reused across calls
    x_recon, h_sparse, metrics = sparse_autoencoder_forward(x, prepared, K)
    jax.block_until_ready((x_recon, h_sparse))
    assert x_recon.shape == x.shape
    assert h_sparse.shape == (8, HIDDEN_DIM)
    assert int((h_sparse != 0).sum()) == K * 8
    ref_recon, ref_hs = _reference_forward(x, params, K)
    assert jnp.allclose(h_sparse, ref_hs, rtol=1e-2, atol=1e-2)
    assert jnp.allclose(x_recon, ref_recon, rtol=1e-2, atol=1e-2)
    assert abs(float(metrics["sparsity_ratio"]) - (1.0 - K / HIDDEN_DIM)) < 1e-6

    # --- case 2: ragged batch exercising the padded-row masking path ---
    x2 = jax.random.normal(kx2, (10, INPUT_DIM), jnp.float32)
    r2, h2, m2 = sparse_autoencoder_forward(x2, prepared, K)
    jax.block_until_ready((r2, h2))
    assert r2.shape == x2.shape and h2.shape == (10, HIDDEN_DIM)
    assert int((h2 != 0).sum()) == K * 10
    assert abs(float(m2["sparsity_ratio"]) - (1.0 - K / HIDDEN_DIM)) < 1e-6

    # --- case 3: larger k exercising the exact bit-pattern bisection threshold ---
    D3, H3, K3 = 32, 256, 20
    x3 = jax.random.normal(kx3, (16, D3), jnp.float32)
    params3 = init_params(kp3, D3, H3)
    r3, h3, m3 = sparse_autoencoder_forward(x3, params3, K3)
    jax.block_until_ready((r3, h3))
    ref_r3, ref_h3 = _reference_forward(x3, params3, K3)
    assert int((h3 != 0).sum()) == K3 * 16
    assert jnp.allclose(h3, ref_h3, rtol=1e-2, atol=1e-2)
    assert jnp.allclose(r3, ref_r3, rtol=1e-2, atol=1e-2)
    assert abs(float(m3["sparsity_ratio"]) - (1.0 - K3 / H3)) < 1e-6

    print("KERNEL_OK")
</pallas_src>

<mosaic_0001>
module attributes {stable_mosaic.version = 11 : i64} {
  func.func @_sae_kernel(%arg0: i32, %arg1: memref<8x128xbf16, #tpu.memory_space<vmem>>, %arg2: memref<128x128xbf16, #tpu.memory_space<vmem>>, %arg3: memref<1x128xf32, #tpu.memory_space<vmem>>, %arg4: memref<128x128xbf16, #tpu.memory_space<vmem>>, %arg5: memref<1x128xf32, #tpu.memory_space<vmem>>, %arg6: memref<8x128xf32, #tpu.memory_space<vmem>>, %arg7: memref<8x128xf32, #tpu.memory_space<vmem>>, %arg8: memref<1x1x128xf32, #tpu.memory_space<vmem>>, %arg9: memref<1x1x128xf32, #tpu.memory_space<vmem>>) attributes {dimension_semantics = [#tpu.dimension_semantics<parallel>], iteration_bounds = array<i64: 1>, scalar_prefetch = 0 : i64, scratch_operands = 0 : i64, tpu.core_type = #tpu.core_type<tc>, window_params = [{transform_indices = @transform_0, window_bounds = array<i64: 8, 128>}, {pipeline_mode = #tpu.pipeline_mode<synchronous>, transform_indices = @transform_1, window_bounds = array<i64: 128, 128>}, {pipeline_mode = #tpu.pipeline_mode<synchronous>, transform_indices = @transform_2, window_bounds = array<i64: 1, 128>}, {pipeline_mode = #tpu.pipeline_mode<synchronous>, transform_indices = @transform_3, window_bounds = array<i64: 128, 128>}, {pipeline_mode = #tpu.pipeline_mode<synchronous>, transform_indices = @transform_4, window_bounds = array<i64: 1, 128>}, {transform_indices = @transform_5, window_bounds = array<i64: 8, 128>}, {transform_indices = @transform_6, window_bounds = array<i64: 8, 128>}, {transform_indices = @transform_7, window_bounds = array<i64: 1, 1, 128>}, {transform_indices = @transform_8, window_bounds = array<i64: 1, 1, 128>}]} {
    %c0 = arith.constant 0 : index
    %c0_0 = arith.constant 0 : index
    %0 = vector.load %arg1[%c0, %c0_0] : memref<8x128xbf16, #tpu.memory_space<vmem>>, vector<8x128xbf16>
    %c0_1 = arith.constant 0 : index
    %c0_2 = arith.constant 0 : index
    %1 = vector.load %arg2[%c0_1, %c0_2] : memref<128x128xbf16, #tpu.memory_space<vmem>>, vector<128x128xbf16>
    %cst = arith.constant dense<0.000000e+00> : vector<8x128xf32>
    %2 = tpu.matmul %0, %1, %cst {dimension_numbers = #tpu.dot_dimension_numbers<[1], [0], [0], [1], [0, 0, 1, 1], [], []>} : vector<8x128xbf16>, vector<128x128xbf16>, vector<8x128xf32> -> vector<8x128xf32>
    %c0_3 = arith.constant 0 : index
    %c0_4 = arith.constant 0 : index
    %3 = vector.load %arg3[%c0_3, %c0_4] : memref<1x128xf32, #tpu.memory_space<vmem>>, vector<1x128xf32>
    %4 = vector.broadcast %3 : vector<1x128xf32> to vector<8x128xf32>
    %5 = arith.addf %2, %4 : vector<8x128xf32>
    %6 = math.absf %5 : vector<8x128xf32>
    %7 = tpu.iota {dimensions = array<i32: 1>} : vector<8x128xi32>
    %c32_i32 = arith.constant 32 : i32
    %8 = vector.broadcast %c32_i32 : i32 to vector<8x128xi32>
    %9 = arith.cmpi slt, %7, %8 : vector<8x128xi32>
    %cst_5 = arith.constant 0xFF800000 : f32
    %10 = vector.broadcast %cst_5 : f32 to vector<8x128xf32>
    %11 = arith.select %9, %6, %10 : vector<8x128xi1>, vector<8x128xf32>
    %cst_6 = arith.constant dense<0xFF800000> : vector<8xf32>
    %12 = vector.multi_reduction <maximumf>, %11, %cst_6 [1] : vector<8x128xf32> to vector<8xf32>
    %13 = vector.shape_cast %12 : vector<8xf32> to vector<8x1xf32>
    %14 = vector.broadcast %13 : vector<8x1xf32> to vector<8x128xf32>
    %15 = arith.cmpf oge, %11, %14 : vector<8x128xf32>
    %16 = arith.extui %15 : vector<8x128xi1> to vector<8x128xi32>
    %17 = arith.sitofp %16 : vector<8x128xi32> to vector<8x128xf32>
    %cst_7 = arith.constant dense<0.000000e+00> : vector<8xf32>
    %18 = vector.multi_reduction <add>, %17, %cst_7 [1] : vector<8x128xf32> to vector<8xf32>
    %19 = vector.shape_cast %18 : vector<8xf32> to vector<8x1xf32>
    %20 = vector.broadcast %13 : vector<8x1xf32> to vector<8x128xf32>
    %21 = arith.cmpf oge, %11, %20 : vector<8x128xf32>
    %cst_8 = arith.constant 0xFF800000 : f32
    %22 = vector.broadcast %cst_8 : f32 to vector<8x128xf32>
    %23 = arith.select %21, %22, %11 : vector<8x128xi1>, vector<8x128xf32>
    %cst_9 = arith.constant dense<0xFF800000> : vector<8xf32>
    %24 = vector.multi_reduction <maximumf>, %23, %cst_9 [1] : vector<8x128xf32> to vector<8xf32>
    %25 = vector.shape_cast %24 : vector<8xf32> to vector<8x1xf32>
    %cst_10 = arith.constant 4.000000e+00 : f32
    %26 = vector.broadcast %cst_10 : f32 to vector<8x1xf32>
    %27 = arith.cmpf oge, %19, %26 : vector<8x1xf32>
    %28 = arith.select %27, %13, %25 : vector<8x1xi1>, vector<8x1xf32>
    %29 = vector.broadcast %28 : vector<8x1xf32> to vector<8x128xf32>
    %30 = arith.cmpf oge, %11, %29 : vector<8x128xf32>
    %31 = arith.extui %30 : vector<8x128xi1> to vector<8x128xi32>
    %32 = arith.sitofp %31 : vector<8x128xi32> to vector<8x128xf32>
    %cst_11 = arith.constant dense<0.000000e+00> : vector<8xf32>
    %33 = vector.multi_reduction <add>, %32, %cst_11 [1] : vector<8x128xf32> to vector<8xf32>
    %34 = vector.shape_cast %33 : vector<8xf32> to vector<8x1xf32>
    %35 = vector.broadcast %28 : vector<8x1xf32> to vector<8x128xf32>
    %36 = arith.cmpf oge, %11, %35 : vector<8x128xf32>
    %cst_12 = arith.constant 0xFF800000 : f32
    %37 = vector.broadcast %cst_12 : f32 to vector<8x128xf32>
    %38 = arith.select %36, %37, %11 : vector<8x128xi1>, vector<8x128xf32>
    %cst_13 = arith.constant dense<0xFF800000> : vector<8xf32>
    %39 = vector.multi_reduction <maximumf>, %38, %cst_13 [1] : vector<8x128xf32> to vector<8xf32>
    %40 = vector.shape_cast %39 : vector<8xf32> to vector<8x1xf32>
    %cst_14 = arith.constant 4.000000e+00 : f32
    %41 = vector.broadcast %cst_14 : f32 to vector<8x1xf32>
    %42 = arith.cmpf oge, %34, %41 : vector<8x1xf32>
    %43 = arith.select %42, %28, %40 : vector<8x1xi1>, vector<8x1xf32>
    %44 = vector.broadcast %43 : vector<8x1xf32> to vector<8x128xf32>
    %45 = arith.cmpf oge, %11, %44 : vector<8x128xf32>
    %46 = arith.extui %45 : vector<8x128xi1> to vector<8x128xi32>
    %47 = arith.sitofp %46 : vector<8x128xi32> to vector<8x128xf32>
    %cst_15 = arith.constant dense<0.000000e+00> : vector<8xf32>
    %48 = vector.multi_reduction <add>, %47, %cst_15 [1] : vector<8x128xf32> to vector<8xf32>
    %49 = vector.shape_cast %48 : vector<8xf32> to vector<8x1xf32>
    %50 = vector.broadcast %43 : vector<8x1xf32> to vector<8x128xf32>
    %51 = arith.cmpf oge, %11, %50 : vector<8x128xf32>
    %cst_16 = arith.constant 0xFF800000 : f32
    %52 = vector.broadcast %cst_16 : f32 to vector<8x128xf32>
    %53 = arith.select %51, %52, %11 : vector<8x128xi1>, vector<8x128xf32>
    %cst_17 = arith.constant dense<0xFF800000> : vector<8xf32>
    %54 = vector.multi_reduction <maximumf>, %53, %cst_17 [1] : vector<8x128xf32> to vector<8xf32>
    %55 = vector.shape_cast %54 : vector<8xf32> to vector<8x1xf32>
    %cst_18 = arith.constant 4.000000e+00 : f32
    %56 = vector.broadcast %cst_18 : f32 to vector<8x1xf32>
    %57 = arith.cmpf oge, %49, %56 : vector<8x1xf32>
    %58 = arith.select %57, %43, %55 : vector<8x1xi1>, vector<8x1xf32>
    %59 = vector.broadcast %58 : vector<8x1xf32> to vector<8x128xf32>
    %60 = arith.cmpf oge, %11, %59 : vector<8x128xf32>
    %cst_19 = arith.constant 0.000000e+00 : f32
    %61 = vector.broadcast %cst_19 : f32 to vector<8x128xf32>
    %62 = arith.select %60, %5, %61 : vector<8x128xi1>, vector<8x128xf32>
    %c0_20 = arith.constant 0 : index
    %c0_21 = arith.constant 0 : index
    %63 = vector.load %arg7[%c0_20, %c0_21] : memref<8x128xf32, #tpu.memory_space<vmem>>, vector<8x128xf32>
    tpu.vector_store %arg7[%c0_20, %c0_21], %62 {strides = array<i32>} : memref<8x128xf32, #tpu.memory_space<vmem>>, vector<8x128xf32>,
    %64 = arith.truncf %62 : vector<8x128xf32> to vector<8x128xbf16>
    %c0_22 = arith.constant 0 : index
    %c0_23 = arith.constant 0 : index
    %65 = vector.load %arg4[%c0_22, %c0_23] : memref<128x128xbf16, #tpu.memory_space<vmem>>, vector<128x128xbf16>
    %cst_24 = arith.constant dense<0.000000e+00> : vector<8x128xf32>
    %66 = tpu.matmul %64, %65, %cst_24 {dimension_numbers = #tpu.dot_dimension_numbers<[1], [0], [0], [1], [0, 0, 1, 1], [], []>} : vector<8x128xbf16>, vector<128x128xbf16>, vector<8x128xf32> -> vector<8x128xf32>
    %c0_25 = arith.constant 0 : index
    %c0_26 = arith.constant 0 : index
    %67 = vector.load %arg5[%c0_25, %c0_26] : memref<1x128xf32, #tpu.memory_space<vmem>>, vector<1x128xf32>
    %68 = vector.broadcast %67 : vector<1x128xf32> to vector<8x128xf32>
    %69 = arith.addf %66, %68 : vector<8x128xf32>
    %c0_27 = arith.constant 0 : index
    %c0_28 = arith.constant 0 : index
    %70 = vector.load %arg6[%c0_27, %c0_28] : memref<8x128xf32, #tpu.memory_space<vmem>>, vector<8x128xf32>
    tpu.vector_store %arg6[%c0_27, %c0_28], %69 {strides = array<i32>} : memref<8x128xf32, #tpu.memory_space<vmem>>, vector<8x128xf32>,
    %cst_29 = arith.constant 0.000000e+00 : f32
    %71 = vector.broadcast %cst_29 : f32 to vector<8x128xf32>
    %72 = arith.cmpf one, %62, %71 : vector<8x128xf32>
    %73 = arith.extui %72 : vector<8x128xi1> to vector<8x128xi32>
    %74 = arith.sitofp %73 : vector<8x128xi32> to vector<8x128xf32>
    %cst_30 = arith.constant dense<0.000000e+00> : vector<128xf32>
    %75 = vector.multi_reduction <add>, %74, %cst_30 [0] : vector<8x128xf32> to vector<128xf32>
    %76 = vector.shape_cast %75 : vector<128xf32> to vector<1x128xf32>
    %77 = vector.shape_cast %76 : vector<1x128xf32> to vector<1x1x128xf32>
    %c0_31 = arith.constant 0 : index
    %c0_32 = arith.constant 0 : index
    %c0_33 = arith.constant 0 : index
    %78 = vector.load %arg8[%c0_31, %c0_32, %c0_33] : memref<1x1x128xf32, #tpu.memory_space<vmem>>, vector<1x1x128xf32>
    tpu.vector_store %arg8[%c0_31, %c0_32, %c0_33], %77 {strides = array<i32>} : memref<1x1x128xf32, #tpu.memory_space<vmem>>, vector<1x1x128xf32>,
    %79 = vector.shape_cast %74 : vector<8x128xf32> to vector<1x8x128xf32>
    %cst_34 = arith.constant dense<0.000000e+00> : vector<1xf32>
    %80 = vector.multi_reduction <add>, %79, %cst_34 [1, 2] : vector<1x8x128xf32> to vector<1xf32>
    %81 = vector.shape_cast %80 : vector<1xf32> to vector<1x1x1xf32>
    %82 = vector.extract %81[0, 0, 0] : f32 from vector<1x1x1xf32>
    %83 = math.absf %62 : vector<8x128xf32>
    %84 = vector.shape_cast %83 : vector<8x128xf32> to vector<1x8x128xf32>
    %cst_35 = arith.constant dense<0.000000e+00> : vector<1xf32>
    %85 = vector.multi_reduction <add>, %84, %cst_35 [1, 2] : vector<1x8x128xf32> to vector<1xf32>
    %86 = vector.shape_cast %85 : vector<1xf32> to vector<1x1x1xf32>
    %87 = vector.extract %86[0, 0, 0] : f32 from vector<1x1x1xf32>
    %88 = arith.mulf %62, %62 : vector<8x128xf32>
    %89 = vector.shape_cast %88 : vector<8x128xf32> to vector<1x8x128xf32>
    %cst_36 = arith.constant dense<0.000000e+00> : vector<1xf32>
    %90 = vector.multi_reduction <add>, %89, %cst_36 [1, 2] : vector<1x8x128xf32> to vector<1xf32>
    %91 = vector.shape_cast %90 : vector<1xf32> to vector<1x1x1xf32>
    %92 = vector.extract %91[0, 0, 0] : f32 from vector<1x1x1xf32>
    %93 = tpu.iota {dimensions = array<i32: 1>} : vector<1x128xi32>
    %c0_i32 = arith.constant 0 : i32
    %94 = vector.broadcast %c0_i32 : i32 to vector<1x128xi32>
    %95 = arith.cmpi eq, %93, %94 : vector<1x128xi32>
    %c1_i32 = arith.constant 1 : i32
    %96 = vector.broadcast %c1_i32 : i32 to vector<1x128xi32>
    %97 = arith.cmpi eq, %93, %96 : vector<1x128xi32>
    %c2_i32 = arith.constant 2 : i32
    %98 = vector.broadcast %c2_i32 : i32 to vector<1x128xi32>
    %99 = arith.cmpi eq, %93, %98 : vector<1x128xi32>
    %cst_37 = arith.constant 0.000000e+00 : f32
    %100 = vector.broadcast %92 : f32 to vector<1x128xf32>
    %101 = vector.broadcast %cst_37 : f32 to vector<1x128xf32>
    %102 = arith.select %99, %100, %101 : vector<1x128xi1>, vector<1x128xf32>
    %103 = vector.broadcast %87 : f32 to vector<1x128xf32>
    %104 = arith.select %97, %103, %102 : vector<1x128xi1>, vector<1x128xf32>
    %105 = vector.broadcast %82 : f32 to vector<1x128xf32>
    %106 = arith.select %95, %105, %104 : vector<1x128xi1>, vector<1x128xf32>
    %107 = vector.shape_cast %106 : vector<1x128xf32> to vector<1x1x128xf32>
    %c0_38 = arith.constant 0 : index
    %c0_39 = arith.constant 0 : index
    %c0_40 = arith.constant 0 : index
    %108 = vector.load %arg9[%c0_38, %c0_39, %c0_40] : memref<1x1x128xf32, #tpu.memory_space<vmem>>, vector<1x1x128xf32>
    tpu.vector_store %arg9[%c0_38, %c0_39, %c0_40], %107 {strides = array<i32>} : memref<1x1x128xf32, #tpu.memory_space<vmem>>, vector<1x1x128xf32>,
    return
  }
  func.func @transform_0(%arg0: i32) -> (i32, i32) {
    %c0_i32 = arith.constant 0 : i32
    %c0_i32_0 = arith.constant 0 : i32
    return %arg0, %c0_i32 : i32, i32
  }
  func.func @transform_1(%arg0: i32) -> (i32, i32) {
    %c0_i32 = arith.constant 0 : i32
    %c0_i32_0 = arith.constant 0 : i32
    %c0_i32_1 = arith.constant 0 : i32
    return %c0_i32, %c0_i32_0 : i32, i32
  }
  func.func @transform_2(%arg0: i32) -> (i32, i32) {
    %c0_i32 = arith.constant 0 : i32
    %c0_i32_0 = arith.constant 0 : i32
    %c0_i32_1 = arith.constant 0 : i32
    return %c0_i32, %c0_i32_0 : i32, i32
  }
  func.func @transform_3(%arg0: i32) -> (i32, i32) {
    %c0_i32 = arith.constant 0 : i32
    %c0_i32_0 = arith.constant 0 : i32
    %c0_i32_1 = arith.constant 0 : i32
    return %c0_i32, %c0_i32_0 : i32, i32
  }
  func.func @transform_4(%arg0: i32) -> (i32, i32) {
    %c0_i32 = arith.constant 0 : i32
    %c0_i32_0 = arith.constant 0 : i32
    %c0_i32_1 = arith.constant 0 : i32
    return %c0_i32, %c0_i32_0 : i32, i32
  }
  func.func @transform_5(%arg0: i32) -> (i32, i32) {
    %c0_i32 = arith.constant 0 : i32
    %c0_i32_0 = arith.constant 0 : i32
    return %arg0, %c0_i32 : i32, i32
  }
  func.func @transform_6(%arg0: i32) -> (i32, i32) {
    %c0_i32 = arith.constant 0 : i32
    %c0_i32_0 = arith.constant 0 : i32
    return %arg0, %c0_i32 : i32, i32
  }
  func.func @transform_7(%arg0: i32) -> (i32, i32, i32) {
    %c0_i32 = arith.constant 0 : i32
    %c0_i32_0 = arith.constant 0 : i32
    %c0_i32_1 = arith.constant 0 : i32
    return %arg0, %c0_i32, %c0_i32_0 : i32, i32, i32
  }
  func.func @transform_8(%arg0: i32) -> (i32, i32, i32) {
    %c0_i32 = arith.constant 0 : i32
    %c0_i32_0 = arith.constant 0 : i32
    %c0_i32_1 = arith.constant 0 : i32
    return %arg0, %c0_i32, %c0_i32_0 : i32, i32, i32
  }
}

module attributes {stable_mosaic.version = 11 : i64} {
  func.func @_sae_kernel(%arg0: i32, %arg1: memref<8x128xbf16, #tpu.memory_space<vmem>>, %arg2: memref<128x128xbf16, #tpu.memory_space<vmem>>, %arg3: memref<1x128xf32, #tpu.memory_space<vmem>>, %arg4: memref<128x128xbf16, #tpu.memory_space<vmem>>, %arg5: memref<1x128xf32, #tpu.memory_space<vmem>>, %arg6: memref<8x128xf32, #tpu.memory_space<vmem>>, %arg7: memref<8x128xf32, #tpu.memory_space<vmem>>, %arg8: memref<1x1x128xf32, #tpu.memory_space<vmem>>, %arg9: memref<1x1x128xf32, #tpu.memory_space<vmem>>) attributes {dimension_semantics = [#tpu.dimension_semantics<parallel>], iteration_bounds = array<i64: 1>, scalar_prefetch = 0 : i64, scratch_operands = 0 : i64, tpu.core_type = #tpu.core_type<tc>, window_params = [{transform_indices = @transform_0, window_bounds = array<i64: 8, 128>}, {pipeline_mode = #tpu.pipeline_mode<synchronous>, transform_indices = @transform_1, window_bounds = array<i64: 128, 128>}, {pipeline_mode = #tpu.pipeline_mode<synchronous>, transform_indices = @transform_2, window_bounds = array<i64: 1, 128>}, {pipeline_mode = #tpu.pipeline_mode<synchronous>, transform_indices = @transform_3, window_bounds = array<i64: 128, 128>}, {pipeline_mode = #tpu.pipeline_mode<synchronous>, transform_indices = @transform_4, window_bounds = array<i64: 1, 128>}, {transform_indices = @transform_5, window_bounds = array<i64: 8, 128>}, {transform_indices = @transform_6, window_bounds = array<i64: 8, 128>}, {transform_indices = @transform_7, window_bounds = array<i64: 1, 1, 128>}, {transform_indices = @transform_8, window_bounds = array<i64: 1, 1, 128>}]} {
    %c0 = arith.constant 0 : index
    %c0_0 = arith.constant 0 : index
    %0 = vector.load %arg1[%c0, %c0_0] : memref<8x128xbf16, #tpu.memory_space<vmem>>, vector<8x128xbf16>
    %c0_1 = arith.constant 0 : index
    %c0_2 = arith.constant 0 : index
    %1 = vector.load %arg2[%c0_1, %c0_2] : memref<128x128xbf16, #tpu.memory_space<vmem>>, vector<128x128xbf16>
    %cst = arith.constant dense<0.000000e+00> : vector<8x128xf32>
    %2 = tpu.matmul %0, %1, %cst {dimension_numbers = #tpu.dot_dimension_numbers<[1], [0], [0], [1], [0, 0, 1, 1], [], []>} : vector<8x128xbf16>, vector<128x128xbf16>, vector<8x128xf32> -> vector<8x128xf32>
    %c0_3 = arith.constant 0 : index
    %c0_4 = arith.constant 0 : index
    %3 = vector.load %arg3[%c0_3, %c0_4] : memref<1x128xf32, #tpu.memory_space<vmem>>, vector<1x128xf32>
    %4 = vector.broadcast %3 : vector<1x128xf32> to vector<8x128xf32>
    %5 = arith.addf %2, %4 : vector<8x128xf32>
    %6 = math.absf %5 : vector<8x128xf32>
    %7 = tpu.iota {dimensions = array<i32: 1>} : vector<8x128xi32>
    %c32_i32 = arith.constant 32 : i32
    %8 = vector.broadcast %c32_i32 : i32 to vector<8x128xi32>
    %9 = arith.cmpi slt, %7, %8 : vector<8x128xi32>
    %cst_5 = arith.constant 0xFF800000 : f32
    %10 = vector.broadcast %cst_5 : f32 to vector<8x128xf32>
    %11 = arith.select %9, %6, %10 : vector<8x128xi1>, vector<8x128xf32>
    %cst_6 = arith.constant dense<0xFF800000> : vector<8xf32>
    %12 = vector.multi_reduction <maximumf>, %11, %cst_6 [1] : vector<8x128xf32> to vector<8xf32>
    %13 = vector.shape_cast %12 : vector<8xf32> to vector<8x1xf32>
    %14 = vector.broadcast %13 : vector<8x1xf32> to vector<8x128xf32>
    %15 = arith.cmpf oge, %11, %14 : vector<8x128xf32>
    %16 = arith.extui %15 : vector<8x128xi1> to vector<8x128xi32>
    %17 = arith.sitofp %16 : vector<8x128xi32> to vector<8x128xf32>
    %cst_7 = arith.constant dense<0.000000e+00> : vector<8xf32>
    %18 = vector.multi_reduction <add>, %17, %cst_7 [1] : vector<8x128xf32> to vector<8xf32>
    %19 = vector.shape_cast %18 : vector<8xf32> to vector<8x1xf32>
    %20 = vector.broadcast %13 : vector<8x1xf32> to vector<8x128xf32>
    %21 = arith.cmpf oge, %11, %20 : vector<8x128xf32>
    %cst_8 = arith.constant 0xFF800000 : f32
    %22 = vector.broadcast %cst_8 : f32 to vector<8x128xf32>
    %23 = arith.select %21, %22, %11 : vector<8x128xi1>, vector<8x128xf32>
    %cst_9 = arith.constant dense<0xFF800000> : vector<8xf32>
    %24 = vector.multi_reduction <maximumf>, %23, %cst_9 [1] : vector<8x128xf32> to vector<8xf32>
    %25 = vector.shape_cast %24 : vector<8xf32> to vector<8x1xf32>
    %cst_10 = arith.constant 4.000000e+00 : f32
    %26 = vector.broadcast %cst_10 : f32 to vector<8x1xf32>
    %27 = arith.cmpf oge, %19, %26 : vector<8x1xf32>
    %28 = arith.select %27, %13, %25 : vector<8x1xi1>, vector<8x1xf32>
    %29 = vector.broadcast %28 : vector<8x1xf32> to vector<8x128xf32>
    %30 = arith.cmpf oge, %11, %29 : vector<8x128xf32>
    %31 = arith.extui %30 : vector<8x128xi1> to vector<8x128xi32>
    %32 = arith.sitofp %31 : vector<8x128xi32> to vector<8x128xf32>
    %cst_11 = arith.constant dense<0.000000e+00> : vector<8xf32>
    %33 = vector.multi_reduction <add>, %32, %cst_11 [1] : vector<8x128xf32> to vector<8xf32>
    %34 = vector.shape_cast %33 : vector<8xf32> to vector<8x1xf32>
    %35 = vector.broadcast %28 : vector<8x1xf32> to vector<8x128xf32>
    %36 = arith.cmpf oge, %11, %35 : vector<8x128xf32>
    %cst_12 = arith.constant 0xFF800000 : f32
    %37 = vector.broadcast %cst_12 : f32 to vector<8x128xf32>
    %38 = arith.select %36, %37, %11 : vector<8x128xi1>, vector<8x128xf32>
    %cst_13 = arith.constant dense<0xFF800000> : vector<8xf32>
    %39 = vector.multi_reduction <maximumf>, %38, %cst_13 [1] : vector<8x128xf32> to vector<8xf32>
    %40 = vector.shape_cast %39 : vector<8xf32> to vector<8x1xf32>
    %cst_14 = arith.constant 4.000000e+00 : f32
    %41 = vector.broadcast %cst_14 : f32 to vector<8x1xf32>
    %42 = arith.cmpf oge, %34, %41 : vector<8x1xf32>
    %43 = arith.select %42, %28, %40 : vector<8x1xi1>, vector<8x1xf32>
    %44 = vector.broadcast %43 : vector<8x1xf32> to vector<8x128xf32>
    %45 = arith.cmpf oge, %11, %44 : vector<8x128xf32>
    %46 = arith.extui %45 : vector<8x128xi1> to vector<8x128xi32>
    %47 = arith.sitofp %46 : vector<8x128xi32> to vector<8x128xf32>
    %cst_15 = arith.constant dense<0.000000e+00> : vector<8xf32>
    %48 = vector.multi_reduction <add>, %47, %cst_15 [1] : vector<8x128xf32> to vector<8xf32>
    %49 = vector.shape_cast %48 : vector<8xf32> to vector<8x1xf32>
    %50 = vector.broadcast %43 : vector<8x1xf32> to vector<8x128xf32>
    %51 = arith.cmpf oge, %11, %50 : vector<8x128xf32>
    %cst_16 = arith.constant 0xFF800000 : f32
    %52 = vector.broadcast %cst_16 : f32 to vector<8x128xf32>
    %53 = arith.select %51, %52, %11 : vector<8x128xi1>, vector<8x128xf32>
    %cst_17 = arith.constant dense<0xFF800000> : vector<8xf32>
    %54 = vector.multi_reduction <maximumf>, %53, %cst_17 [1] : vector<8x128xf32> to vector<8xf32>
    %55 = vector.shape_cast %54 : vector<8xf32> to vector<8x1xf32>
    %cst_18 = arith.constant 4.000000e+00 : f32
    %56 = vector.broadcast %cst_18 : f32 to vector<8x1xf32>
    %57 = arith.cmpf oge, %49, %56 : vector<8x1xf32>
    %58 = arith.select %57, %43, %55 : vector<8x1xi1>, vector<8x1xf32>
    %59 = vector.broadcast %58 : vector<8x1xf32> to vector<8x128xf32>
    %60 = arith.cmpf oge, %11, %59 : vector<8x128xf32>
    %cst_19 = arith.constant 0.000000e+00 : f32
    %61 = vector.broadcast %cst_19 : f32 to vector<8x128xf32>
    %62 = arith.select %60, %5, %61 : vector<8x128xi1>, vector<8x128xf32>
    %c0_20 = arith.constant 0 : index
    %c0_21 = arith.constant 0 : index
    %63 = vector.load %arg7[%c0_20, %c0_21] : memref<8x128xf32, #tpu.memory_space<vmem>>, vector<8x128xf32>
    tpu.vector_store %arg7[%c0_20, %c0_21], %62 {strides = array<i32>} : memref<8x128xf32, #tpu.memory_space<vmem>>, vector<8x128xf32>,
    %64 = arith.truncf %62 : vector<8x128xf32> to vector<8x128xbf16>
    %c0_22 = arith.constant 0 : index
    %c0_23 = arith.constant 0 : index
    %65 = vector.load %arg4[%c0_22, %c0_23] : memref<128x128xbf16, #tpu.memory_space<vmem>>, vector<128x128xbf16>
    %cst_24 = arith.constant dense<0.000000e+00> : vector<8x128xf32>
    %66 = tpu.matmul %64, %65, %cst_24 {dimension_numbers = #tpu.dot_dimension_numbers<[1], [0], [0], [1], [0, 0, 1, 1], [], []>} : vector<8x128xbf16>, vector<128x128xbf16>, vector<8x128xf32> -> vector<8x128xf32>
    %c0_25 = arith.constant 0 : index
    %c0_26 = arith.constant 0 : index
    %67 = vector.load %arg5[%c0_25, %c0_26] : memref<1x128xf32, #tpu.memory_space<vmem>>, vector<1x128xf32>
    %68 = vector.broadcast %67 : vector<1x128xf32> to vector<8x128xf32>
    %69 = arith.addf %66, %68 : vector<8x128xf32>
    %c0_27 = arith.constant 0 : index
    %c0_28 = arith.constant 0 : index
    %70 = vector.load %arg6[%c0_27, %c0_28] : memref<8x128xf32, #tpu.memory_space<vmem>>, vector<8x128xf32>
    tpu.vector_store %arg6[%c0_27, %c0_28], %69 {strides = array<i32>} : memref<8x128xf32, #tpu.memory_space<vmem>>, vector<8x128xf32>,
    %cst_29 = arith.constant 0.000000e+00 : f32
    %71 = vector.broadcast %cst_29 : f32 to vector<8x128xf32>
    %72 = arith.cmpf one, %62, %71 : vector<8x128xf32>
    %73 = arith.extui %72 : vector<8x128xi1> to vector<8x128xi32>
    %74 = arith.sitofp %73 : vector<8x128xi32> to vector<8x128xf32>
    %cst_30 = arith.constant dense<0.000000e+00> : vector<128xf32>
    %75 = vector.multi_reduction <add>, %74, %cst_30 [0] : vector<8x128xf32> to vector<128xf32>
    %76 = vector.shape_cast %75 : vector<128xf32> to vector<1x128xf32>
    %77 = vector.shape_cast %76 : vector<1x128xf32> to vector<1x1x128xf32>
    %c0_31 = arith.constant 0 : index
    %c0_32 = arith.constant 0 : index
    %c0_33 = arith.constant 0 : index
    %78 = vector.load %arg8[%c0_31, %c0_32, %c0_33] : memref<1x1x128xf32, #tpu.memory_space<vmem>>, vector<1x1x128xf32>
    tpu.vector_store %arg8[%c0_31, %c0_32, %c0_33], %77 {strides = array<i32>} : memref<1x1x128xf32, #tpu.memory_space<vmem>>, vector<1x1x128xf32>,
    %79 = vector.shape_cast %74 : vector<8x128xf32> to vector<1x8x128xf32>
    %cst_34 = arith.constant dense<0.000000e+00> : vector<1xf32>
    %80 = vector.multi_reduction <add>, %79, %cst_34 [1, 2] : vector<1x8x128xf32> to vector<1xf32>
    %81 = vector.shape_cast %80 : vector<1xf32> to vector<1x1x1xf32>
    %82 = vector.extract %81[0, 0, 0] : f32 from vector<1x1x1xf32>
    %83 = math.absf %62 : vector<8x128xf32>
    %84 = vector.shape_cast %83 : vector<8x128xf32> to vector<1x8x128xf32>
    %cst_35 = arith.constant dense<0.000000e+00> : vector<1xf32>
    %85 = vector.multi_reduction <add>, %84, %cst_35 [1, 2] : vector<1x8x128xf32> to vector<1xf32>
    %86 = vector.shape_cast %85 : vector<1xf32> to vector<1x1x1xf32>
    %87 = vector.extract %86[0, 0, 0] : f32 from vector<1x1x1xf32>
    %88 = arith.mulf %62, %62 : vector<8x128xf32>
    %89 = vector.shape_cast %88 : vector<8x128xf32> to vector<1x8x128xf32>
    %cst_36 = arith.constant dense<0.000000e+00> : vector<1xf32>
    %90 = vector.multi_reduction <add>, %89, %cst_36 [1, 2] : vector<1x8x128xf32> to vector<1xf32>
    %91 = vector.shape_cast %90 : vector<1xf32> to vector<1x1x1xf32>
    %92 = vector.extract %91[0, 0, 0] : f32 from vector<1x1x1xf32>
    %93 = tpu.iota {dimensions = array<i32: 1>} : vector<1x128xi32>
    %c0_i32 = arith.constant 0 : i32
    %94 = vector.broadcast %c0_i32 : i32 to vector<1x128xi32>
    %95 = arith.cmpi eq, %93, %94 : vector<1x128xi32>
    %c1_i32 = arith.constant 1 : i32
    %96 = vector.broadcast %c1_i32 : i32 to vector<1x128xi32>
    %97 = arith.cmpi eq, %93, %96 : vector<1x128xi32>
    %c2_i32 = arith.constant 2 : i32
    %98 = vector.broadcast %c2_i32 : i32 to vector<1x128xi32>
    %99 = arith.cmpi eq, %93, %98 : vector<1x128xi32>
    %cst_37 = arith.constant 0.000000e+00 : f32
    %100 = vector.broadcast %92 : f32 to vector<1x128xf32>
    %101 = vector.broadcast %cst_37 : f32 to vector<1x128xf32>
    %102 = arith.select %99, %100, %101 : vector<1x128xi1>, vector<1x128xf32>
    %103 = vector.broadcast %87 : f32 to vector<1x128xf32>
    %104 = arith.select %97, %103, %102 : vector<1x128xi1>, vector<1x128xf32>
    %105 = vector.broadcast %82 : f32 to vector<1x128xf32>
    %106 = arith.select %95, %105, %104 : vector<1x128xi1>, vector<1x128xf32>
    %107 = vector.shape_cast %106 : vector<1x128xf32> to vector<1x1x128xf32>
    %c0_38 = arith.constant 0 : index
    %c0_39 = arith.constant 0 : index
    %c0_40 = arith.constant 0 : index
    %108 = vector.load %arg9[%c0_38, %c0_39, %c0_40] : memref<1x1x128xf32, #tpu.memory_space<vmem>>, vector<1x1x128xf32>
    tpu.vector_store %arg9[%c0_38, %c0_39, %c0_40], %107 {strides = array<i32>} : memref<1x1x128xf32, #tpu.memory_space<vmem>>, vector<1x1x128xf32>,
    return
  }
  func.func @transform_0(%arg0: i32) -> (i32, i32) {
    %c0_i32 = arith.constant 0 : i32
    %c0_i32_0 = arith.constant 0 : i32
    return %arg0, %c0_i32 : i32, i32
  }
  func.func @transform_1(%arg0: i32) -> (i32, i32) {
    %c0_i32 = arith.constant 0 : i32
    %c0_i32_0 = arith.constant 0 : i32
    %c0_i32_1 = arith.constant 0 : i32
    return %c0_i32, %c0_i32_0 : i32, i32
  }
  func.func @transform_2(%arg0: i32) -> (i32, i32) {
    %c0_i32 = arith.constant 0 : i32
    %c0_i32_0 = arith.constant 0 : i32
    %c0_i32_1 = arith.constant 0 : i32
    return %c0_i32, %c0_i32_0 : i32, i32
  }
  func.func @transform_3(%arg0: i32) -> (i32, i32) {
    %c0_i32 = arith.constant 0 : i32
    %c0_i32_0 = arith.constant 0 : i32
    %c0_i32_1 = arith.constant 0 : i32
    return %c0_i32, %c0_i32_0 : i32, i32
  }
  func.func @transform_4(%arg0: i32) -> (i32, i32) {
    %c0_i32 = arith.constant 0 : i32
    %c0_i32_0 = arith.constant 0 : i32
    %c0_i32_1 = arith.constant 0 : i32
    return %c0_i32, %c0_i32_0 : i32, i32
  }
  func.func @transform_5(%arg0: i32) -> (i32, i32) {
    %c0_i32 = arith.constant 0 : i32
    %c0_i32_0 = arith.constant 0 : i32
    return %arg0, %c0_i32 : i32, i32
  }
  func.func @transform_6(%arg0: i32) -> (i32, i32) {
    %c0_i32 = arith.constant 0 : i32
    %c0_i32_0 = arith.constant 0 : i32
    return %arg0, %c0_i32 : i32, i32
  }
  func.func @transform_7(%arg0: i32) -> (i32, i32, i32) {
    %c0_i32 = arith.constant 0 : i32
    %c0_i32_0 = arith.constant 0 : i32
    %c0_i32_1 = arith.constant 0 : i32
    return %arg0, %c0_i32, %c0_i32_0 : i32, i32, i32
  }
  func.func @transform_8(%arg0: i32) -> (i32, i32, i32) {
    %c0_i32 = arith.constant 0 : i32
    %c0_i32_0 = arith.constant 0 : i32
    %c0_i32_1 = arith.constant 0 : i32
    return %arg0, %c0_i32, %c0_i32_0 : i32, i32, i32
  }
}

</mosaic_0001>

<llo_original>
// kernel: tpu_custom_call.1
$region0: #{tpu_custom_call.1}
  #allocation0 [shape = 'u32[]', space=smem, size = 0x4, offset = 0x4, fixed_abs, tag = 'smem constant byte address 0x4 - core index']
  #allocation1 [shape = 'u32[144,128]{1,0:T(1,128)}', space=vmem, size = 0x12000, scoped, tag = 'internal scratch']
  %s0 = inlined_call_operand.hbm [shape: bf16[8,128], index: 0, kind: input, shape index: {}]
  %s1 = inlined_call_operand.hbm [shape: bf16[128,128], index: 1, kind: input, shape index: {}]
  %s2 = inlined_call_operand.vmem [shape: f32[1,128], index: 2, kind: input, shape index: {}]
  %s3 = inlined_call_operand.hbm [shape: bf16[128,128], index: 3, kind: input, shape index: {}]
  %s4 = inlined_call_operand.vmem [shape: f32[1,128], index: 4, kind: input, shape index: {}]
  %s5 = inlined_call_operand.hbm [shape: f32[8,128], index: 5, kind: output, shape index: {0}]
  %s6 = inlined_call_operand.hbm [shape: f32[8,128], index: 6, kind: output, shape index: {1}]
  %s7 = inlined_call_operand.hbm [shape: f32[1,1,128], index: 7, kind: output, shape index: {2}]
  %s8 = inlined_call_operand.hbm [shape: f32[1,1,128], index: 8, kind: output, shape index: {3}]
  %9 = xla_tuple %s5, %s6, %s7, %s8
  %s10 = sld [smem:[#allocation0]]
  $region66: #{tpu_custom_call.1} parent=0
    _
  %s12 = ssub.s32 1, %s10
  %s13 = scalar_select 0, %s12, %s10
  $region1: #{tpu_custom_call.1} parent=0
    #allocation2 [shape = 'u8[2048]{0}', space=vmem, size = 0x800, scoped, tag = 'input window, operand 0, single buffered']
    #allocation3 [shape = 's32[1]{0}', space=sflag, size = 0x4, scoped, tag = 'scoped memory for tpu_custom_call.1']
    #allocation4 [shape = 's32[1]{0}', space=sflag, size = 0x4, scoped, tag = 'scoped memory for tpu_custom_call.1']
    #allocation5 [shape = 'u8[32768]{0}', space=vmem, size = 0x8000, scoped, tag = 'input window, operand 1, single buffered']
    #allocation6 [shape = 's32[1]{0}', space=sflag, size = 0x4, scoped, tag = 'scoped memory for tpu_custom_call.1']
    #allocation7 [shape = 'u8[32768]{0}', space=vmem, size = 0x8000, scoped, tag = 'input window, operand 3, single buffered']
    #allocation8 [shape = 'u8[4096]{0}', space=vmem, size = 0x1000, scoped, tag = 'output window, operand 0, single buffered']
    #allocation9 [shape = 'u8[4096]{0}', space=vmem, size = 0x1000, scoped, tag = 'output window, operand 1, single buffered']
    #allocation10 [shape = 's32[1]{0}', space=sflag, size = 0x4, scoped, tag = 'scoped memory for tpu_custom_call.1']
    #allocation11 [shape = 'u8[512]{0}', space=vmem, size = 0x400, scoped, tag = 'output window, operand 2, single buffered']
    #allocation12 [shape = 'u8[512]{0}', space=vmem, size = 0x400, scoped, tag = 'output window, operand 3, single buffered']
    #allocation13 [shape = 's32[1]{0}', space=sflag, size = 0x4, scoped, tag = 'scoped memory for tpu_custom_call.1']
    %14 = vsyncpa [#allocation3], 0
    %15 = vsyncpa [#allocation6], 0
    %16 = vsyncpa [#allocation4], 0
    %17 = vsyncpa [#allocation10], 0
    %18 = vsyncpa [#allocation13], 0
    // Predicated region
    $region2: #{tpu_custom_call.1} parent=1 // pred_check
      _
    $region3: #{tpu_custom_call.1} parent=1 // pred_check_branch
      %20 = sbr.rel (0) target = $region5
    $region4: #{tpu_custom_call.1} parent=1 // pred_region
      %s22 = ssub.s32 64, 64
      %23 = vsyncadd [#allocation3], %s22
      %s25 = sshll.u32 [#allocation2], 4
      %s26 = int_to_ptr.vmem [resolvable:$true] %s25
      %28 = dma.hbm_to_vmem [thread:$0]  %s0, 64, %s26, [#allocation3]
    $region5: #{tpu_custom_call.1} parent=1 // pred_fallthru
      _
    // Predicated region
    $region6: #{tpu_custom_call.1} parent=1 // pred_check
      _
    $region7: #{tpu_custom_call.1} parent=1 // pred_check_branch
      %30 = sbr.rel (0) target = $region9
    $region8: #{tpu_custom_call.1} parent=1 // pred_region
      %s32 = ssub.s32 1024, 1024
      %33 = vsyncadd [#allocation6], %s32
      %s34 = sshll.u32 [#allocation5], 4
      %s35 = int_to_ptr.vmem [resolvable:$true] %s34
      %40 = dma.hbm_to_vmem [thread:$0]  %s1, 1024, %s35, [#allocation6], 64, 64, 4
    $region9: #{tpu_custom_call.1} parent=1 // pred_fallthru
      _
    // Predicated region
    $region10: #{tpu_custom_call.1} parent=1 // pred_check
      _
    $region11: #{tpu_custom_call.1} parent=1 // pred_check_branch
      %42 = sbr.rel (0) target = $region13
    $region12: #{tpu_custom_call.1} parent=1 // pred_region
      _
    $region13: #{tpu_custom_call.1} parent=1 // pred_fallthru
      _
    // Predicated region
    $region14: #{tpu_custom_call.1} parent=1 // pred_check
      _
    $region15: #{tpu_custom_call.1} parent=1 // pred_check_branch
      %44 = sbr.rel (0) target = $region17
    $region16: #{tpu_custom_call.1} parent=1 // pred_region
      %s46 = ssub.s32 1024, 1024
      %47 = vsyncadd [#allocation6], %s46
      %s48 = sshll.u32 [#allocation7], 4
      %s49 = int_to_ptr.vmem [resolvable:$true] %s48
      %54 = dma.hbm_to_vmem [thread:$0]  %s3, 1024, %s49, [#allocation6], 64, 64, 4
    $region17: #{tpu_custom_call.1} parent=1 // pred_fallthru
      _
    // Predicated region
    $region18: #{tpu_custom_call.1} parent=1 // pred_check
      _
    $region19: #{tpu_custom_call.1} parent=1 // pred_check_branch
      %56 = sbr.rel (0) target = $region21
    $region20: #{tpu_custom_call.1} parent=1 // pred_region
      _
    $region21: #{tpu_custom_call.1} parent=1 // pred_fallthru
      _
    // Predicated region
    $region22: #{tpu_custom_call.1} parent=1 // pred_check
      _
    $region23: #{tpu_custom_call.1} parent=1 // pred_check_branch
      %58 = sbr.rel (0) target = $region25
    $region24: #{tpu_custom_call.1} parent=1 // pred_region
      %59 = dma.done [#allocation3], 64
    $region25: #{tpu_custom_call.1} parent=1 // pred_fallthru
      _
    // Predicated region
    $region26: #{tpu_custom_call.1} parent=1 // pred_check
      _
    $region27: #{tpu_custom_call.1} parent=1 // pred_check_branch
      %61 = sbr.rel (0) target = $region29
    $region28: #{tpu_custom_call.1} parent=1 // pred_region
      %62 = dma.done [#allocation6], 1024
    $region29: #{tpu_custom_call.1} parent=1 // pred_fallthru
      _
    // Predicated region
    $region30: #{tpu_custom_call.1} parent=1 // pred_check
      _
    $region31: #{tpu_custom_call.1} parent=1 // pred_check_branch
      %64 = sbr.rel (0) target = $region33
    $region32: #{tpu_custom_call.1} parent=1 // pred_region
      %65 = dma.done [#allocation6], 1024
    $region33: #{tpu_custom_call.1} parent=1 // pred_fallthru
      _
    %v67 = vld [vmem:[#allocation2] sm:$0xf]
    %v68 = vld [vmem:[#allocation5] sm:$0xf]
    %v69 = vld [vmem:[#allocation5 + $0x4] sm:$0xf]
    %v70 = vld [vmem:[#allocation5 + $0x8] sm:$0xf]
    %v71 = vld [vmem:[#allocation5 + $0xc] sm:$0xf]
    %v72 = vld [vmem:[#allocation5 + $0x10] sm:$0xf]
    %v73 = vld [vmem:[#allocation5 + $0x14] sm:$0xf]
    %v74 = vld [vmem:[#allocation5 + $0x18] sm:$0xf]
    %v75 = vld [vmem:[#allocation5 + $0x1c] sm:$0xf]
    %v76 = vld [vmem:[#allocation5 + $0x20] sm:$0xf]
    %v77 = vld [vmem:[#allocation5 + $0x24] sm:$0xf]
    %v78 = vld [vmem:[#allocation5 + $0x28] sm:$0xf]
    %v79 = vld [vmem:[#allocation5 + $0x2c] sm:$0xf]
    %v80 = vld [vmem:[#allocation5 + $0x30] sm:$0xf]
    %v81 = vld [vmem:[#allocation5 + $0x34] sm:$0xf]
    %v82 = vld [vmem:[#allocation5 + $0x38] sm:$0xf]
    %v83 = vld [vmem:[#allocation5 + $0x3c] sm:$0xf]
    %v84 = vld [vmem:[%s2] sm:$0x1]
    %v86 = vlaneseq
    %v87 = vshrl.u32 %v86, 7
    %v88 = vsub.s32 0, %v87
    %v89 = vrot.slane %v84, %v88
    %v107 = vunpack.c.l.b16 %v68
    %v108 = vunpack.c.l.b16 %v69
    %v109 = vunpack.c.l.b16 %v70
    %v110 = vunpack.c.l.b16 %v71
    %v111 = vunpack.c.l.b16 %v72
    %v112 = vunpack.c.l.b16 %v73
    %v113 = vunpack.c.l.b16 %v74
    %v114 = vunpack.c.l.b16 %v75
    %v115 = vunpack.c.l.b16 %v76
    %v116 = vunpack.c.l.b16 %v77
    %v117 = vunpack.c.l.b16 %v78
    %v118 = vunpack.c.l.b16 %v79
    %v119 = vunpack.c.l.b16 %v80
    %v120 = vunpack.c.l.b16 %v81
    %v121 = vunpack.c.l.b16 %v82
    %v122 = vunpack.c.l.b16 %v83
    %v123 = vpack.c.b16 %v108, %v107
    %v124 = vpack.c.b16 %v110, %v109
    %v125 = vpack.c.b16 %v112, %v111
    %v126 = vpack.c.b16 %v114, %v113
    %v127 = vpack.c.b16 %v116, %v115
    %v128 = vpack.c.b16 %v118, %v117
    %v129 = vpack.c.b16 %v120, %v119
    %v130 = vpack.c.b16 %v122, %v121
    %139 = vmatprep.subr.bf16.mxu0 0
    %140 = vmatpush1.bf16.msra.mxu0 %v123
    %141 = vmatprep.subr.bf16.mxu0 0
    %142 = vmatpush1.bf16.msra.mxu0 %v124
    %143 = vmatprep.subr.bf16.mxu0 0
    %144 = vmatpush1.bf16.msra.mxu0 %v125
    %145 = vmatprep.subr.bf16.mxu0 0
    %146 = vmatpush1.bf16.msra.mxu0 %v126
    %147 = vmatprep.subr.bf16.mxu0 0
    %148 = vmatpush1.bf16.msra.mxu0 %v127
    %149 = vmatprep.subr.bf16.mxu0 0
    %150 = vmatpush1.bf16.msra.mxu0 %v128
    %151 = vmatprep.subr.bf16.mxu0 0
    %152 = vmatpush1.bf16.msra.mxu0 %v129
    %153 = vmatprep.subr.bf16.mxu0 0
    %154 = vmatpush1.bf16.msra.mxu0 %v130
    %155 = vmatprep.subr.bf16.mxu0 0
    %156 = vmatpush1.bf16.msra.mxu0 0
    %157 = vmatprep.subr.bf16.mxu0 0
    %158 = vmatpush1.bf16.msra.mxu0 0
    %159 = vmatprep.subr.bf16.mxu0 0
    %160 = vmatpush1.bf16.msra.mxu0 0
    %161 = vmatprep.subr.bf16.mxu0 0
    %162 = vmatpush1.bf16.msra.mxu0 0
    %163 = vmatprep.subr.bf16.mxu0 0
    %164 = vmatpush1.bf16.msra.mxu0 0
    %165 = vmatprep.subr.bf16.mxu0 0
    %166 = vmatpush1.bf16.msra.mxu0 0
    %167 = vmatprep.subr.bf16.mxu0 0
    %168 = vmatpush1.bf16.msra.mxu0 0
    %169 = vmatprep.subr.bf16.mxu0 0
    %170 = vmatpush1.bf16.msra.mxu0 0
    %171 = vmatprep.mubr.bf16.mxu0 0
    %172 = vmatmul.mubr.bf16.gmra.mrb[0].mxu0 %v67
    %v173 = vpop.f32.mrb[0].mxu0
    %v174 = vadd.f32 %v89, %v173
    %v175 = vpop.f32.mrb[0].mxu0
    %v176 = vpop.f32.mrb[0].mxu0
    %v177 = vpop.f32.mrb[0].mxu0
    %178 = vdwg.mxu0
    %v179 = vand.u32 2147483647, %v174
    %v180 = vlaneseq
    %v181 = vand.u32 %v180, 127
    %vm182 = vcmp.lt.s32.totalorder %v181, 32
    %v183 = vsel %vm182, %v179, -inf
    %184 = vmax.xlane.f32.xlu0 %v183
    %v185 = vpop.xlane.xlu0 %184
    %vm186 = vcmp.ge.f32.partialorder %v183, %v185
    %v187 = vsel %vm186, 1, 0
    %v188 = vcvt.s32.f32 %v187
    %189 = vadd.xlane.f32.xlu0 %v188
    %v190 = vpop.xlane.xlu0 %189
    %v191 = vsel %vm186, -inf, %v183
    %192 = vmax.xlane.f32.xlu0 %v191
    %v193 = vpop.xlane.xlu0 %192
    %vm194 = vcmp.ge.f32.partialorder %v190, 4.0
    %v195 = vsel %vm194, %v185, %v193
    %vm196 = vcmp.ge.f32.partialorder %v183, %v195
    %v197 = vsel %vm196, 1, 0
    %v198 = vcvt.s32.f32 %v197
    %199 = vadd.xlane.f32.xlu0 %v198
    %v200 = vpop.xlane.xlu0 %199
    %v201 = vsel %vm196, -inf, %v183
    %202 = vmax.xlane.f32.xlu0 %v201
    %v203 = vpop.xlane.xlu0 %202
    %vm204 = vcmp.ge.f32.partialorder %v200, 4.0
    %v205 = vsel %vm204, %v195, %v203
    %vm206 = vcmp.ge.f32.partialorder %v183, %v205
    %v207 = vsel %vm206, 1, 0
    %v208 = vcvt.s32.f32 %v207
    %209 = vadd.xlane.f32.xlu0 %v208
    %v210 = vpop.xlane.xlu0 %209
    %v211 = vsel %vm206, -inf, %v183
    %212 = vmax.xlane.f32.xlu0 %v211
    %v213 = vpop.xlane.xlu0 %212
    %vm214 = vcmp.ge.f32.partialorder %v210, 4.0
    %v215 = vsel %vm214, %v205, %v213
    %vm216 = vcmp.ge.f32.partialorder %v183, %v215
    %v217 = vsel %vm216, %v174, 0.0
    %218 = vst [vmem:[#allocation9] sm:$0xff] %v217
    %v219 = vpack.c.bf16 %v217, %v217
    %v220 = vld [vmem:[#allocation7] sm:$0xf]
    %v221 = vld [vmem:[#allocation7 + $0x4] sm:$0xf]
    %v222 = vld [vmem:[#allocation7 + $0x8] sm:$0xf]
    %v223 = vld [vmem:[#allocation7 + $0xc] sm:$0xf]
    %v224 = vld [vmem:[#allocation7 + $0x10] sm:$0xf]
    %v225 = vld [vmem:[#allocation7 + $0x14] sm:$0xf]
    %v226 = vld [vmem:[#allocation7 + $0x18] sm:$0xf]
    %v227 = vld [vmem:[#allocation7 + $0x1c] sm:$0xf]
    %v228 = vld [vmem:[#allocation7 + $0x20] sm:$0xf]
    %v229 = vld [vmem:[#allocation7 + $0x24] sm:$0xf]
    %v230 = vld [vmem:[#allocation7 + $0x28] sm:$0xf]
    %v231 = vld [vmem:[#allocation7 + $0x2c] sm:$0xf]
    %v232 = vld [vmem:[#allocation7 + $0x30] sm:$0xf]
    %v233 = vld [vmem:[#allocation7 + $0x34] sm:$0xf]
    %v234 = vld [vmem:[#allocation7 + $0x38] sm:$0xf]
    %v235 = vld [vmem:[#allocation7 + $0x3c] sm:$0xf]
    %v236 = vld [vmem:[%s4] sm:$0x1]
    %v238 = vlaneseq
    %v239 = vshrl.u32 %v238, 7
    %v240 = vsub.s32 0, %v239
    %v241 = vrot.slane %v236, %v240
    %v259 = vunpack.c.l.b16 %v220
    %v260 = vunpack.c.l.b16 %v221
    %v261 = vunpack.c.l.b16 %v222
    %v262 = vunpack.c.l.b16 %v223
    %v263 = vunpack.c.l.b16 %v224
    %v264 = vunpack.c.l.b16 %v225
    %v265 = vunpack.c.l.b16 %v226
    %v266 = vunpack.c.l.b16 %v227
    %v267 = vunpack.c.l.b16 %v228
    %v268 = vunpack.c.l.b16 %v229
    %v269 = vunpack.c.l.b16 %v230
    %v270 = vunpack.c.l.b16 %v231
    %v271 = vunpack.c.l.b16 %v232
    %v272 = vunpack.c.l.b16 %v233
    %v273 = vunpack.c.l.b16 %v234
    %v274 = vunpack.c.l.b16 %v235
    %v275 = vpack.c.b16 %v260, %v259
    %v276 = vpack.c.b16 %v262, %v261
    %v277 = vpack.c.b16 %v264, %v263
    %v278 = vpack.c.b16 %v266, %v265
    %v279 = vpack.c.b16 %v268, %v267
    %v280 = vpack.c.b16 %v270, %v269
    %v281 = vpack.c.b16 %v272, %v271
    %v282 = vpack.c.b16 %v274, %v273
    %291 = vmatprep.subr.bf16.mxu0 0
    %292 = vmatpush1.bf16.msra.mxu0 %v275
    %293 = vmatprep.subr.bf16.mxu0 0
    %294 = vmatpush1.bf16.msra.mxu0 %v276
    %295 = vmatprep.subr.bf16.mxu0 0
    %296 = vmatpush1.bf16.msra.mxu0 %v277
    %297 = vmatprep.subr.bf16.mxu0 0
    %298 = vmatpush1.bf16.msra.mxu0 %v278
    %299 = vmatprep.subr.bf16.mxu0 0
    %300 = vmatpush1.bf16.msra.mxu0 %v279
    %301 = vmatprep.subr.bf16.mxu0 0
    %302 = vmatpush1.bf16.msra.mxu0 %v280
    %303 = vmatprep.subr.bf16.mxu0 0
    %304 = vmatpush1.bf16.msra.mxu0 %v281
    %305 = vmatprep.subr.bf16.mxu0 0
    %306 = vmatpush1.bf16.msra.mxu0 %v282
    %307 = vmatprep.subr.bf16.mxu0 0
    %308 = vmatpush1.bf16.msra.mxu0 0
    %309 = vmatprep.subr.bf16.mxu0 0
    %310 = vmatpush1.bf16.msra.mxu0 0
    %311 = vmatprep.subr.bf16.mxu0 0
    %312 = vmatpush1.bf16.msra.mxu0 0
    %313 = vmatprep.subr.bf16.mxu0 0
    %314 = vmatpush1.bf16.msra.mxu0 0
    %315 = vmatprep.subr.bf16.mxu0 0
    %316 = vmatpush1.bf16.msra.mxu0 0
    %317 = vmatprep.subr.bf16.mxu0 0
    %318 = vmatpush1.bf16.msra.mxu0 0
    %319 = vmatprep.subr.bf16.mxu0 0
    %320 = vmatpush1.bf16.msra.mxu0 0
    %321 = vmatprep.subr.bf16.mxu0 0
    %322 = vmatpush1.bf16.msra.mxu0 0
    %323 = vmatprep.mubr.bf16.mxu0 0
    %324 = vmatmul.mubr.bf16.gmra.mrb[0].mxu0 %v219
    %v325 = vpop.f32.mrb[0].mxu0
    %v326 = vadd.f32 %v241, %v325
    %v327 = vpop.f32.mrb[0].mxu0
    %v328 = vpop.f32.mrb[0].mxu0
    %v329 = vpop.f32.mrb[0].mxu0
    %330 = vdwg.mxu0
    %331 = vst [vmem:[#allocation8] sm:$0xff] %v326
    %vm332 = vcmp.ne.f32.partialorder %v217, 0.0
    %v333 = vsel %vm332, 1, 0
    %v334 = vcvt.s32.f32 %v333
    %v335 = vrot.slane %v334, 4
    %v336 = vadd.f32 %v334, %v335
    %v337 = vrot.slane %v336, 2
    %v338 = vadd.f32 %v336, %v337
    %v339 = vrot.slane %v338, 1
    %v340 = vadd.f32 %v338, %v339
    %341 = vst [vmem:[#allocation11] sm:$0x1] %v340
    %342 = vadd.xlane.f32.xlu0 %v334
    %v343 = vpop.xlane.xlu0 %342
    %v344 = vrot.slane %v343, 4
    %v345 = vadd.f32 %v343, %v344
    %v346 = vrot.slane %v345, 2
    %v347 = vadd.f32 %v345, %v346
    %v348 = vrot.slane %v347, 1
    %v349 = vadd.f32 %v347, %v348
    %s350 = vtos %v349
    %v351 = vand.u32 2147483647, %v217
    %352 = vadd.xlane.f32.xlu0 %v351
    %v353 = vpop.xlane.xlu0 %352
    %v354 = vrot.slane %v353, 4
    %v355 = vadd.f32 %v353, %v354
    %v356 = vrot.slane %v355, 2
    %v357 = vadd.f32 %v355, %v356
    %v358 = vrot.slane %v357, 1
    %v359 = vadd.f32 %v357, %v358
    %s360 = vtos %v359
    %v361 = vmul.f32 %v217, %v217
    %362 = vadd.xlane.f32.xlu0 %v361
    %v363 = vpop.xlane.xlu0 %362
    %v364 = vrot.slane %v363, 4
    %v365 = vadd.f32 %v363, %v364
    %v366 = vrot.slane %v365, 2
    %v367 = vadd.f32 %v365, %v366
    %v368 = vrot.slane %v367, 1
    %v369 = vadd.f32 %v367, %v368
    %s370 = vtos %v369
    %vm371 = vcmp.eq.s32.totalorder %v181, 0
    %vm372 = vcmp.eq.s32.totalorder %v181, 1
    %vm373 = vcmp.eq.s32.totalorder %v181, 2
    %v374 = vstv %s370
    %v375 = vsel %vm373, %v374, 0.0
    %v376 = vstv %s360
    %v377 = vsel %vm372, %v376, %v375
    %v378 = vstv %s350
    %v379 = vsel %vm371, %v378, %v377
    %380 = vst [vmem:[#allocation12] sm:$0x1] %v379
    // Predicated region
    $region34: #{tpu_custom_call.1} parent=1 // pred_check
      _
    $region35: #{tpu_custom_call.1} parent=1 // pred_check_branch
      %382 = sbr.rel (0) target = $region37
    $region36: #{tpu_custom_call.1} parent=1 // pred_region
      %s384 = ssub.s32 128, 128
      %385 = vsyncadd [#allocation4], %s384
      %s387 = sshll.u32 [#allocation8], 4
      %s388 = int_to_ptr.vmem [resolvable:$true] %s387
      %390 = dma.vmem_to_hbm [thread:$0]  %s388, 128, %s5, [#allocation4]
    $region37: #{tpu_custom_call.1} parent=1 // pred_fallthru
      _
    // Predicated region
    $region38: #{tpu_custom_call.1} parent=1 // pred_check
      _
    $region39: #{tpu_custom_call.1} parent=1 // pred_check_branch
      %392 = sbr.rel (0) target = $region41
    $region40: #{tpu_custom_call.1} parent=1 // pred_region
      %s394 = ssub.s32 128, 128
      %395 = vsyncadd [#allocation10], %s394
      %s397 = sshll.u32 [#allocation9], 4
      %s398 = int_to_ptr.vmem [resolvable:$true] %s397
      %400 = dma.vmem_to_hbm [thread:$0]  %s398, 128, %s6, [#allocation10]
    $region41: #{tpu_custom_call.1} parent=1 // pred_fallthru
      _
    // Predicated region
    $region42: #{tpu_custom_call.1} parent=1 // pred_check
      _
    $region43: #{tpu_custom_call.1} parent=1 // pred_check_branch
      %402 = sbr.rel (0) target = $region45
    $region44: #{tpu_custom_call.1} parent=1 // pred_region
      %s404 = ssub.s32 16, 16
      %405 = vsyncadd [#allocation10], %s404
      %s407 = sshll.u32 [#allocation11], 4
      %s408 = int_to_ptr.vmem [resolvable:$true] %s407
      %410 = dma.vmem_to_hbm [thread:$0]  %s408, 16, %s7, [#allocation10]
    $region45: #{tpu_custom_call.1} parent=1 // pred_fallthru
      _
    // Predicated region
    $region46: #{tpu_custom_call.1} parent=1 // pred_check
      _
    $region47: #{tpu_custom_call.1} parent=1 // pred_check_branch
      %412 = sbr.rel (0) target = $region49
    $region48: #{tpu_custom_call.1} parent=1 // pred_region
      %s414 = ssub.s32 16, 16
      %415 = vsyncadd [#allocation13], %s414
      %s417 = sshll.u32 [#allocation12], 4
      %s418 = int_to_ptr.vmem [resolvable:$true] %s417
      %420 = dma.vmem_to_hbm [thread:$0]  %s418, 16, %s8, [#allocation13]
    $region49: #{tpu_custom_call.1} parent=1 // pred_fallthru
      _
    // Predicated region
    $region50: #{tpu_custom_call.1} parent=1 // pred_check
      _
    $region51: #{tpu_custom_call.1} parent=1 // pred_check_branch
      %422 = sbr.rel (0) target = $region53
    $region52: #{tpu_custom_call.1} parent=1 // pred_region
      %423 = dma.done [#allocation4], 128
    $region53: #{tpu_custom_call.1} parent=1 // pred_fallthru
      _
    // Predicated region
    $region54: #{tpu_custom_call.1} parent=1 // pred_check
      _
    $region55: #{tpu_custom_call.1} parent=1 // pred_check_branch
      %425 = sbr.rel (0) target = $region57
    $region56: #{tpu_custom_call.1} parent=1 // pred_region
      %426 = dma.done [#allocation10], 128
    $region57: #{tpu_custom_call.1} parent=1 // pred_fallthru
      _
    // Predicated region
    $region58: #{tpu_custom_call.1} parent=1 // pred_check
      _
    $region59: #{tpu_custom_call.1} parent=1 // pred_check_branch
      %428 = sbr.rel (0) target = $region61
    $region60: #{tpu_custom_call.1} parent=1 // pred_region
      %429 = dma.done [#allocation10], 16
    $region61: #{tpu_custom_call.1} parent=1 // pred_fallthru
      _
    // Predicated region
    $region62: #{tpu_custom_call.1} parent=1 // pred_check
      _
    $region63: #{tpu_custom_call.1} parent=1 // pred_check_branch
      %431 = sbr.rel (0) target = $region65
    $region64: #{tpu_custom_call.1} parent=1 // pred_region
      %432 = dma.done [#allocation13], 16
    $region65: #{tpu_custom_call.1} parent=1 // pred_fallthru
      _
    %433 = vsyncpa [#allocation3], 1
    %434 = vsyncpa [#allocation6], 1
    %435 = vsyncpa [#allocation4], 1
    %436 = vsyncpa [#allocation10], 1
    %437 = vsyncpa [#allocation13], 1

// kernel: tpu_custom_call.1
$region0: #{tpu_custom_call.1}
  #allocation0 [shape = 'u32[]', space=smem, size = 0x4, offset = 0x4, fixed_abs, tag = 'smem constant byte address 0x4 - core index']
  #allocation1 [shape = 'u32[144,128]{1,0:T(1,128)}', space=vmem, size = 0x12000, scoped, tag = 'internal scratch']
  %s0 = inlined_call_operand.hbm [shape: bf16[8,128], index: 0, kind: input, shape index: {}]
  %s1 = inlined_call_operand.hbm [shape: bf16[128,128], index: 1, kind: input, shape index: {}]
  %s2 = inlined_call_operand.vmem [shape: f32[1,128], index: 2, kind: input, shape index: {}]
  %s3 = inlined_call_operand.hbm [shape: bf16[128,128], index: 3, kind: input, shape index: {}]
  %s4 = inlined_call_operand.vmem [shape: f32[1,128], index: 4, kind: input, shape index: {}]
  %s5 = inlined_call_operand.hbm [shape: f32[8,128], index: 5, kind: output, shape index: {0}]
  %s6 = inlined_call_operand.hbm [shape: f32[8,128], index: 6, kind: output, shape index: {1}]
  %s7 = inlined_call_operand.hbm [shape: f32[1,1,128], index: 7, kind: output, shape index: {2}]
  %s8 = inlined_call_operand.hbm [shape: f32[1,1,128], index: 8, kind: output, shape index: {3}]
  %9 = xla_tuple %s5, %s6, %s7, %s8
  %s10 = sld [smem:[#allocation0]]
  $region66: #{tpu_custom_call.1} parent=0
    _
  %s12 = ssub.s32 1, %s10
  %s13 = scalar_select 0, %s12, %s10
  $region1: #{tpu_custom_call.1} parent=0
    #allocation2 [shape = 'u8[2048]{0}', space=vmem, size = 0x800, scoped, tag = 'input window, operand 0, single buffered']
    #allocation3 [shape = 's32[1]{0}', space=sflag, size = 0x4, scoped, tag = 'scoped memory for tpu_custom_call.1']
    #allocation4 [shape = 's32[1]{0}', space=sflag, size = 0x4, scoped, tag = 'scoped memory for tpu_custom_call.1']
    #allocation5 [shape = 'u8[32768]{0}', space=vmem, size = 0x8000, scoped, tag = 'input window, operand 1, single buffered']
    #allocation6 [shape = 's32[1]{0}', space=sflag, size = 0x4, scoped, tag = 'scoped memory for tpu_custom_call.1']
    #allocation7 [shape = 'u8[32768]{0}', space=vmem, size = 0x8000, scoped, tag = 'input window, operand 3, single buffered']
    #allocation8 [shape = 'u8[4096]{0}', space=vmem, size = 0x1000, scoped, tag = 'output window, operand 0, single buffered']
    #allocation9 [shape = 'u8[4096]{0}', space=vmem, size = 0x1000, scoped, tag = 'output window, operand 1, single buffered']
    #allocation10 [shape = 's32[1]{0}', space=sflag, size = 0x4, scoped, tag = 'scoped memory for tpu_custom_call.1']
    #allocation11 [shape = 'u8[512]{0}', space=vmem, size = 0x400, scoped, tag = 'output window, operand 2, single buffered']
    #allocation12 [shape = 'u8[512]{0}', space=vmem, size = 0x400, scoped, tag = 'output window, operand 3, single buffered']
    #allocation13 [shape = 's32[1]{0}', space=sflag, size = 0x4, scoped, tag = 'scoped memory for tpu_custom_call.1']
    %14 = vsyncpa [#allocation3], 0
    %15 = vsyncpa [#allocation6], 0
    %16 = vsyncpa [#allocation4], 0
    %17 = vsyncpa [#allocation10], 0
    %18 = vsyncpa [#allocation13], 0
    // Predicated region
    $region2: #{tpu_custom_call.1} parent=1 // pred_check
      _
    $region3: #{tpu_custom_call.1} parent=1 // pred_check_branch
      %20 = sbr.rel (0) target = $region5
    $region4: #{tpu_custom_call.1} parent=1 // pred_region
      %s22 = ssub.s32 64, 64
      %23 = vsyncadd [#allocation3], %s22
      %s25 = sshll.u32 [#allocation2], 4
      %s26 = int_to_ptr.vmem [resolvable:$true] %s25
      %28 = dma.hbm_to_vmem [thread:$0]  %s0, 64, %s26, [#allocation3]
    $region5: #{tpu_custom_call.1} parent=1 // pred_fallthru
      _
    // Predicated region
    $region6: #{tpu_custom_call.1} parent=1 // pred_check
      _
    $region7: #{tpu_custom_call.1} parent=1 // pred_check_branch
      %30 = sbr.rel (0) target = $region9
    $region8: #{tpu_custom_call.1} parent=1 // pred_region
      %s32 = ssub.s32 1024, 1024
      %33 = vsyncadd [#allocation6], %s32
      %s34 = sshll.u32 [#allocation5], 4
      %s35 = int_to_ptr.vmem [resolvable:$true] %s34
      %40 = dma.hbm_to_vmem [thread:$0]  %s1, 1024, %s35, [#allocation6], 64, 64, 4
    $region9: #{tpu_custom_call.1} parent=1 // pred_fallthru
      _
    // Predicated region
    $region10: #{tpu_custom_call.1} parent=1 // pred_check
      _
    $region11: #{tpu_custom_call.1} parent=1 // pred_check_branch
      %42 = sbr.rel (0) target = $region13
    $region12: #{tpu_custom_call.1} parent=1 // pred_region
      _
    $region13: #{tpu_custom_call.1} parent=1 // pred_fallthru
      _
    // Predicated region
    $region14: #{tpu_custom_call.1} parent=1 // pred_check
      _
    $region15: #{tpu_custom_call.1} parent=1 // pred_check_branch
      %44 = sbr.rel (0) target = $region17
    $region16: #{tpu_custom_call.1} parent=1 // pred_region
      %s46 = ssub.s32 1024, 1024
      %47 = vsyncadd [#allocation6], %s46
      %s48 = sshll.u32 [#allocation7], 4
      %s49 = int_to_ptr.vmem [resolvable:$true] %s48
      %54 = dma.hbm_to_vmem [thread:$0]  %s3, 1024, %s49, [#allocation6], 64, 64, 4
    $region17: #{tpu_custom_call.1} parent=1 // pred_fallthru
      _
    // Predicated region
    $region18: #{tpu_custom_call.1} parent=1 // pred_check
      _
    $region19: #{tpu_custom_call.1} parent=1 // pred_check_branch
      %56 = sbr.rel (0) target = $region21
    $region20: #{tpu_custom_call.1} parent=1 // pred_region
      _
    $region21: #{tpu_custom_call.1} parent=1 // pred_fallthru
      _
    // Predicated region
    $region22: #{tpu_custom_call.1} parent=1 // pred_check
      _
    $region23: #{tpu_custom_call.1} parent=1 // pred_check_branch
      %58 = sbr.rel (0) target = $region25
    $region24: #{tpu_custom_call.1} parent=1 // pred_region
      %59 = dma.done [#allocation3], 64
    $region25: #{tpu_custom_call.1} parent=1 // pred_fallthru
      _
    // Predicated region
    $region26: #{tpu_custom_call.1} parent=1 // pred_check
      _
    $region27: #{tpu_custom_call.1} parent=1 // pred_check_branch
      %61 = sbr.rel (0) target = $region29
    $region28: #{tpu_custom_call.1} parent=1 // pred_region
      %62 = dma.done [#allocation6], 1024
    $region29: #{tpu_custom_call.1} parent=1 // pred_fallthru
      _
    // Predicated region
    $region30: #{tpu_custom_call.1} parent=1 // pred_check
      _
    $region31: #{tpu_custom_call.1} parent=1 // pred_check_branch
      %64 = sbr.rel (0) target = $region33
    $region32: #{tpu_custom_call.1} parent=1 // pred_region
      %65 = dma.done [#allocation6], 1024
    $region33: #{tpu_custom_call.1} parent=1 // pred_fallthru
      _
    %v67 = vld [vmem:[#allocation2] sm:$0xf]
    %v68 = vld [vmem:[#allocation5] sm:$0xf]
    %v69 = vld [vmem:[#allocation5 + $0x4] sm:$0xf]
    %v70 = vld [vmem:[#allocation5 + $0x8] sm:$0xf]
    %v71 = vld [vmem:[#allocation5 + $0xc] sm:$0xf]
    %v72 = vld [vmem:[#allocation5 + $0x10] sm:$0xf]
    %v73 = vld [vmem:[#allocation5 + $0x14] sm:$0xf]
    %v74 = vld [vmem:[#allocation5 + $0x18] sm:$0xf]
    %v75 = vld [vmem:[#allocation5 + $0x1c] sm:$0xf]
    %v76 = vld [vmem:[#allocation5 + $0x20] sm:$0xf]
    %v77 = vld [vmem:[#allocation5 + $0x24] sm:$0xf]
    %v78 = vld [vmem:[#allocation5 + $0x28] sm:$0xf]
    %v79 = vld [vmem:[#allocation5 + $0x2c] sm:$0xf]
    %v80 = vld [vmem:[#allocation5 + $0x30] sm:$0xf]
    %v81 = vld [vmem:[#allocation5 + $0x34] sm:$0xf]
    %v82 = vld [vmem:[#allocation5 + $0x38] sm:$0xf]
    %v83 = vld [vmem:[#allocation5 + $0x3c] sm:$0xf]
    %v84 = vld [vmem:[%s2] sm:$0x1]
    %v86 = vlaneseq
    %v87 = vshrl.u32 %v86, 7
    %v88 = vsub.s32 0, %v87
    %v89 = vrot.slane %v84, %v88
    %v107 = vunpack.c.l.b16 %v68
    %v108 = vunpack.c.l.b16 %v69
    %v109 = vunpack.c.l.b16 %v70
    %v110 = vunpack.c.l.b16 %v71
    %v111 = vunpack.c.l.b16 %v72
    %v112 = vunpack.c.l.b16 %v73
    %v113 = vunpack.c.l.b16 %v74
    %v114 = vunpack.c.l.b16 %v75
    %v115 = vunpack.c.l.b16 %v76
    %v116 = vunpack.c.l.b16 %v77
    %v117 = vunpack.c.l.b16 %v78
    %v118 = vunpack.c.l.b16 %v79
    %v119 = vunpack.c.l.b16 %v80
    %v120 = vunpack.c.l.b16 %v81
    %v121 = vunpack.c.l.b16 %v82
    %v122 = vunpack.c.l.b16 %v83
    %v123 = vpack.c.b16 %v108, %v107
    %v124 = vpack.c.b16 %v110, %v109
    %v125 = vpack.c.b16 %v112, %v111
    %v126 = vpack.c.b16 %v114, %v113
    %v127 = vpack.c.b16 %v116, %v115
    %v128 = vpack.c.b16 %v118, %v117
    %v129 = vpack.c.b16 %v120, %v119
    %v130 = vpack.c.b16 %v122, %v121
    %139 = vmatprep.subr.bf16.mxu0 0
    %140 = vmatpush1.bf16.msra.mxu0 %v123
    %141 = vmatprep.subr.bf16.mxu0 0
    %142 = vmatpush1.bf16.msra.mxu0 %v124
    %143 = vmatprep.subr.bf16.mxu0 0
    %144 = vmatpush1.bf16.msra.mxu0 %v125
    %145 = vmatprep.subr.bf16.mxu0 0
    %146 = vmatpush1.bf16.msra.mxu0 %v126
    %147 = vmatprep.subr.bf16.mxu0 0
    %148 = vmatpush1.bf16.msra.mxu0 %v127
    %149 = vmatprep.subr.bf16.mxu0 0
    %150 = vmatpush1.bf16.msra.mxu0 %v128
    %151 = vmatprep.subr.bf16.mxu0 0
    %152 = vmatpush1.bf16.msra.mxu0 %v129
    %153 = vmatprep.subr.bf16.mxu0 0
    %154 = vmatpush1.bf16.msra.mxu0 %v130
    %155 = vmatprep.subr.bf16.mxu0 0
    %156 = vmatpush1.bf16.msra.mxu0 0
    %157 = vmatprep.subr.bf16.mxu0 0
    %158 = vmatpush1.bf16.msra.mxu0 0
    %159 = vmatprep.subr.bf16.mxu0 0
    %160 = vmatpush1.bf16.msra.mxu0 0
    %161 = vmatprep.subr.bf16.mxu0 0
    %162 = vmatpush1.bf16.msra.mxu0 0
    %163 = vmatprep.subr.bf16.mxu0 0
    %164 = vmatpush1.bf16.msra.mxu0 0
    %165 = vmatprep.subr.bf16.mxu0 0
    %166 = vmatpush1.bf16.msra.mxu0 0
    %167 = vmatprep.subr.bf16.mxu0 0
    %168 = vmatpush1.bf16.msra.mxu0 0
    %169 = vmatprep.subr.bf16.mxu0 0
    %170 = vmatpush1.bf16.msra.mxu0 0
    %171 = vmatprep.mubr.bf16.mxu0 0
    %172 = vmatmul.mubr.bf16.gmra.mrb[0].mxu0 %v67
    %v173 = vpop.f32.mrb[0].mxu0
    %v174 = vadd.f32 %v89, %v173
    %v175 = vpop.f32.mrb[0].mxu0
    %v176 = vpop.f32.mrb[0].mxu0
    %v177 = vpop.f32.mrb[0].mxu0
    %178 = vdwg.mxu0
    %v179 = vand.u32 2147483647, %v174
    %v180 = vlaneseq
    %v181 = vand.u32 %v180, 127
    %vm182 = vcmp.lt.s32.totalorder %v181, 32
    %v183 = vsel %vm182, %v179, -inf
    %184 = vmax.xlane.f32.xlu0 %v183
    %v185 = vpop.xlane.xlu0 %184
    %vm186 = vcmp.ge.f32.partialorder %v183, %v185
    %v187 = vsel %vm186, 1, 0
    %v188 = vcvt.s32.f32 %v187
    %189 = vadd.xlane.f32.xlu0 %v188
    %v190 = vpop.xlane.xlu0 %189
    %v191 = vsel %vm186, -inf, %v183
    %192 = vmax.xlane.f32.xlu0 %v191
    %v193 = vpop.xlane.xlu0 %192
    %vm194 = vcmp.ge.f32.partialorder %v190, 4.0
    %v195 = vsel %vm194, %v185, %v193
    %vm196 = vcmp.ge.f32.partialorder %v183, %v195
    %v197 = vsel %vm196, 1, 0
    %v198 = vcvt.s32.f32 %v197
    %199 = vadd.xlane.f32.xlu0 %v198
    %v200 = vpop.xlane.xlu0 %199
    %v201 = vsel %vm196, -inf, %v183
    %202 = vmax.xlane.f32.xlu0 %v201
    %v203 = vpop.xlane.xlu0 %202
    %vm204 = vcmp.ge.f32.partialorder %v200, 4.0
    %v205 = vsel %vm204, %v195, %v203
    %vm206 = vcmp.ge.f32.partialorder %v183, %v205
    %v207 = vsel %vm206, 1, 0
    %v208 = vcvt.s32.f32 %v207
    %209 = vadd.xlane.f32.xlu0 %v208
    %v210 = vpop.xlane.xlu0 %209
    %v211 = vsel %vm206, -inf, %v183
    %212 = vmax.xlane.f32.xlu0 %v211
    %v213 = vpop.xlane.xlu0 %212
    %vm214 = vcmp.ge.f32.partialorder %v210, 4.0
    %v215 = vsel %vm214, %v205, %v213
    %vm216 = vcmp.ge.f32.partialorder %v183, %v215
    %v217 = vsel %vm216, %v174, 0.0
    %218 = vst [vmem:[#allocation9] sm:$0xff] %v217
    %v219 = vpack.c.bf16 %v217, %v217
    %v220 = vld [vmem:[#allocation7] sm:$0xf]
    %v221 = vld [vmem:[#allocation7 + $0x4] sm:$0xf]
    %v222 = vld [vmem:[#allocation7 + $0x8] sm:$0xf]
    %v223 = vld [vmem:[#allocation7 + $0xc] sm:$0xf]
    %v224 = vld [vmem:[#allocation7 + $0x10] sm:$0xf]
    %v225 = vld [vmem:[#allocation7 + $0x14] sm:$0xf]
    %v226 = vld [vmem:[#allocation7 + $0x18] sm:$0xf]
    %v227 = vld [vmem:[#allocation7 + $0x1c] sm:$0xf]
    %v228 = vld [vmem:[#allocation7 + $0x20] sm:$0xf]
    %v229 = vld [vmem:[#allocation7 + $0x24] sm:$0xf]
    %v230 = vld [vmem:[#allocation7 + $0x28] sm:$0xf]
    %v231 = vld [vmem:[#allocation7 + $0x2c] sm:$0xf]
    %v232 = vld [vmem:[#allocation7 + $0x30] sm:$0xf]
    %v233 = vld [vmem:[#allocation7 + $0x34] sm:$0xf]
    %v234 = vld [vmem:[#allocation7 + $0x38] sm:$0xf]
    %v235 = vld [vmem:[#allocation7 + $0x3c] sm:$0xf]
    %v236 = vld [vmem:[%s4] sm:$0x1]
    %v238 = vlaneseq
    %v239 = vshrl.u32 %v238, 7
    %v240 = vsub.s32 0, %v239
    %v241 = vrot.slane %v236, %v240
    %v259 = vunpack.c.l.b16 %v220
    %v260 = vunpack.c.l.b16 %v221
    %v261 = vunpack.c.l.b16 %v222
    %v262 = vunpack.c.l.b16 %v223
    %v263 = vunpack.c.l.b16 %v224
    %v264 = vunpack.c.l.b16 %v225
    %v265 = vunpack.c.l.b16 %v226
    %v266 = vunpack.c.l.b16 %v227
    %v267 = vunpack.c.l.b16 %v228
    %v268 = vunpack.c.l.b16 %v229
    %v269 = vunpack.c.l.b16 %v230
    %v270 = vunpack.c.l.b16 %v231
    %v271 = vunpack.c.l.b16 %v232
    %v272 = vunpack.c.l.b16 %v233
    %v273 = vunpack.c.l.b16 %v234
    %v274 = vunpack.c.l.b16 %v235
    %v275 = vpack.c.b16 %v260, %v259
    %v276 = vpack.c.b16 %v262, %v261
    %v277 = vpack.c.b16 %v264, %v263
    %v278 = vpack.c.b16 %v266, %v265
    %v279 = vpack.c.b16 %v268, %v267
    %v280 = vpack.c.b16 %v270, %v269
    %v281 = vpack.c.b16 %v272, %v271
    %v282 = vpack.c.b16 %v274, %v273
    %291 = vmatprep.subr.bf16.mxu0 0
    %292 = vmatpush1.bf16.msra.mxu0 %v275
    %293 = vmatprep.subr.bf16.mxu0 0
    %294 = vmatpush1.bf16.msra.mxu0 %v276
    %295 = vmatprep.subr.bf16.mxu0 0
    %296 = vmatpush1.bf16.msra.mxu0 %v277
    %297 = vmatprep.subr.bf16.mxu0 0
    %298 = vmatpush1.bf16.msra.mxu0 %v278
    %299 = vmatprep.subr.bf16.mxu0 0
    %300 = vmatpush1.bf16.msra.mxu0 %v279
    %301 = vmatprep.subr.bf16.mxu0 0
    %302 = vmatpush1.bf16.msra.mxu0 %v280
    %303 = vmatprep.subr.bf16.mxu0 0
    %304 = vmatpush1.bf16.msra.mxu0 %v281
    %305 = vmatprep.subr.bf16.mxu0 0
    %306 = vmatpush1.bf16.msra.mxu0 %v282
    %307 = vmatprep.subr.bf16.mxu0 0
    %308 = vmatpush1.bf16.msra.mxu0 0
    %309 = vmatprep.subr.bf16.mxu0 0
    %310 = vmatpush1.bf16.msra.mxu0 0
    %311 = vmatprep.subr.bf16.mxu0 0
    %312 = vmatpush1.bf16.msra.mxu0 0
    %313 = vmatprep.subr.bf16.mxu0 0
    %314 = vmatpush1.bf16.msra.mxu0 0
    %315 = vmatprep.subr.bf16.mxu0 0
    %316 = vmatpush1.bf16.msra.mxu0 0
    %317 = vmatprep.subr.bf16.mxu0 0
    %318 = vmatpush1.bf16.msra.mxu0 0
    %319 = vmatprep.subr.bf16.mxu0 0
    %320 = vmatpush1.bf16.msra.mxu0 0
    %321 = vmatprep.subr.bf16.mxu0 0
    %322 = vmatpush1.bf16.msra.mxu0 0
    %323 = vmatprep.mubr.bf16.mxu0 0
    %324 = vmatmul.mubr.bf16.gmra.mrb[0].mxu0 %v219
    %v325 = vpop.f32.mrb[0].mxu0
    %v326 = vadd.f32 %v241, %v325
    %v327 = vpop.f32.mrb[0].mxu0
    %v328 = vpop.f32.mrb[0].mxu0
    %v329 = vpop.f32.mrb[0].mxu0
    %330 = vdwg.mxu0
    %331 = vst [vmem:[#allocation8] sm:$0xff] %v326
    %vm332 = vcmp.ne.f32.partialorder %v217, 0.0
    %v333 = vsel %vm332, 1, 0
    %v334 = vcvt.s32.f32 %v333
    %v335 = vrot.slane %v334, 4
    %v336 = vadd.f32 %v334, %v335
    %v337 = vrot.slane %v336, 2
    %v338 = vadd.f32 %v336, %v337
    %v339 = vrot.slane %v338, 1
    %v340 = vadd.f32 %v338, %v339
    %341 = vst [vmem:[#allocation11] sm:$0x1] %v340
    %342 = vadd.xlane.f32.xlu0 %v334
    %v343 = vpop.xlane.xlu0 %342
    %v344 = vrot.slane %v343, 4
    %v345 = vadd.f32 %v343, %v344
    %v346 = vrot.slane %v345, 2
    %v347 = vadd.f32 %v345, %v346
    %v348 = vrot.slane %v347, 1
    %v349 = vadd.f32 %v347, %v348
    %s350 = vtos %v349
    %v351 = vand.u32 2147483647, %v217
    %352 = vadd.xlane.f32.xlu0 %v351
    %v353 = vpop.xlane.xlu0 %352
    %v354 = vrot.slane %v353, 4
    %v355 = vadd.f32 %v353, %v354
    %v356 = vrot.slane %v355, 2
    %v357 = vadd.f32 %v355, %v356
    %v358 = vrot.slane %v357, 1
    %v359 = vadd.f32 %v357, %v358
    %s360 = vtos %v359
    %v361 = vmul.f32 %v217, %v217
    %362 = vadd.xlane.f32.xlu0 %v361
    %v363 = vpop.xlane.xlu0 %362
    %v364 = vrot.slane %v363, 4
    %v365 = vadd.f32 %v363, %v364
    %v366 = vrot.slane %v365, 2
    %v367 = vadd.f32 %v365, %v366
    %v368 = vrot.slane %v367, 1
    %v369 = vadd.f32 %v367, %v368
    %s370 = vtos %v369
    %vm371 = vcmp.eq.s32.totalorder %v181, 0
    %vm372 = vcmp.eq.s32.totalorder %v181, 1
    %vm373 = vcmp.eq.s32.totalorder %v181, 2
    %v374 = vstv %s370
    %v375 = vsel %vm373, %v374, 0.0
    %v376 = vstv %s360
    %v377 = vsel %vm372, %v376, %v375
    %v378 = vstv %s350
    %v379 = vsel %vm371, %v378, %v377
    %380 = vst [vmem:[#allocation12] sm:$0x1] %v379
    // Predicated region
    $region34: #{tpu_custom_call.1} parent=1 // pred_check
      _
    $region35: #{tpu_custom_call.1} parent=1 // pred_check_branch
      %382 = sbr.rel (0) target = $region37
    $region36: #{tpu_custom_call.1} parent=1 // pred_region
      %s384 = ssub.s32 128, 128
      %385 = vsyncadd [#allocation4], %s384
      %s387 = sshll.u32 [#allocation8], 4
      %s388 = int_to_ptr.vmem [resolvable:$true] %s387
      %390 = dma.vmem_to_hbm [thread:$0]  %s388, 128, %s5, [#allocation4]
    $region37: #{tpu_custom_call.1} parent=1 // pred_fallthru
      _
    // Predicated region
    $region38: #{tpu_custom_call.1} parent=1 // pred_check
      _
    $region39: #{tpu_custom_call.1} parent=1 // pred_check_branch
      %392 = sbr.rel (0) target = $region41
    $region40: #{tpu_custom_call.1} parent=1 // pred_region
      %s394 = ssub.s32 128, 128
      %395 = vsyncadd [#allocation10], %s394
      %s397 = sshll.u32 [#allocation9], 4
      %s398 = int_to_ptr.vmem [resolvable:$true] %s397
      %400 = dma.vmem_to_hbm [thread:$0]  %s398, 128, %s6, [#allocation10]
    $region41: #{tpu_custom_call.1} parent=1 // pred_fallthru
      _
    // Predicated region
    $region42: #{tpu_custom_call.1} parent=1 // pred_check
      _
    $region43: #{tpu_custom_call.1} parent=1 // pred_check_branch
      %402 = sbr.rel (0) target = $region45
    $region44: #{tpu_custom_call.1} parent=1 // pred_region
      %s404 = ssub.s32 16, 16
      %405 = vsyncadd [#allocation10], %s404
      %s407 = sshll.u32 [#allocation11], 4
      %s408 = int_to_ptr.vmem [resolvable:$true] %s407
      %410 = dma.vmem_to_hbm [thread:$0]  %s408, 16, %s7, [#allocation10]
    $region45: #{tpu_custom_call.1} parent=1 // pred_fallthru
      _
    // Predicated region
    $region46: #{tpu_custom_call.1} parent=1 // pred_check
      _
    $region47: #{tpu_custom_call.1} parent=1 // pred_check_branch
      %412 = sbr.rel (0) target = $region49
    $region48: #{tpu_custom_call.1} parent=1 // pred_region
      %s414 = ssub.s32 16, 16
      %415 = vsyncadd [#allocation13], %s414
      %s417 = sshll.u32 [#allocation12], 4
      %s418 = int_to_ptr.vmem [resolvable:$true] %s417
      %420 = dma.vmem_to_hbm [thread:$0]  %s418, 16, %s8, [#allocation13]
    $region49: #{tpu_custom_call.1} parent=1 // pred_fallthru
      _
    // Predicated region
    $region50: #{tpu_custom_call.1} parent=1 // pred_check
      _
    $region51: #{tpu_custom_call.1} parent=1 // pred_check_branch
      %422 = sbr.rel (0) target = $region53
    $region52: #{tpu_custom_call.1} parent=1 // pred_region
      %423 = dma.done [#allocation4], 128
    $region53: #{tpu_custom_call.1} parent=1 // pred_fallthru
      _
    // Predicated region
    $region54: #{tpu_custom_call.1} parent=1 // pred_check
      _
    $region55: #{tpu_custom_call.1} parent=1 // pred_check_branch
      %425 = sbr.rel (0) target = $region57
    $region56: #{tpu_custom_call.1} parent=1 // pred_region
      %426 = dma.done [#allocation10], 128
    $region57: #{tpu_custom_call.1} parent=1 // pred_fallthru
      _
    // Predicated region
    $region58: #{tpu_custom_call.1} parent=1 // pred_check
      _
    $region59: #{tpu_custom_call.1} parent=1 // pred_check_branch
      %428 = sbr.rel (0) target = $region61
    $region60: #{tpu_custom_call.1} parent=1 // pred_region
      %429 = dma.done [#allocation10], 16
    $region61: #{tpu_custom_call.1} parent=1 // pred_fallthru
      _
    // Predicated region
    $region62: #{tpu_custom_call.1} parent=1 // pred_check
      _
    $region63: #{tpu_custom_call.1} parent=1 // pred_check_branch
      %431 = sbr.rel (0) target = $region65
    $region64: #{tpu_custom_call.1} parent=1 // pred_region
      %432 = dma.done [#allocation13], 16
    $region65: #{tpu_custom_call.1} parent=1 // pred_fallthru
      _
    %433 = vsyncpa [#allocation3], 1
    %434 = vsyncpa [#allocation6], 1
    %435 = vsyncpa [#allocation4], 1
    %436 = vsyncpa [#allocation10], 1
    %437 = vsyncpa [#allocation13], 1

</llo_original>
